<compile_context>
chip_gen: v6e
topology: v6e:2x2x1
jax: 0.10.0
libtpu: 0.0.40
codegen_flags: <defaults>
</compile_context>

<pallas_src>
import functools

import numpy as np
import jax
import jax.numpy as jnp
from jax import lax
from jax.experimental import pallas as pl
from jax.experimental.pallas import tpu as pltpu

_NEG_BIG = -1e30  # finite "masked" additive bias (avoids NaN for fully-masked rows)


def mha_kernel(xq_ref, xk_ref, xv_ref, wq_ref, wk_ref, wv_ref, wo_ref, *rest,
               heads, has_mask):
    if has_mask:
        bias_ref, o_ref = rest
    else:
        (o_ref,) = rest

    xq = xq_ref[0]          # (S, D), compute dtype (bf16 by default)
    xk = xk_ref[0]
    xv = xv_ref[0]
    cdt = xq.dtype

    # Fused full-MXU-width projections (1/sqrt(d_key) is pre-folded into wq).
    q_all = jnp.dot(xq, wq_ref[...], preferred_element_type=jnp.float32).astype(cdt)
    k_all = jnp.dot(xk, wk_ref[...], preferred_element_type=jnp.float32).astype(cdt)
    v_all = jnp.dot(xv, wv_ref[...], preferred_element_type=jnp.float32).astype(cdt)

    S, D = q_all.shape
    dk = D // heads

    # Heads is a static Python constant -> static lane slices, no dynamic indexing
    # and no per-head weight DMA.
    ctx_parts = []
    for h in range(heads):
        lo = h * dk
        q = q_all[:, lo:lo + dk]            # (S, dk)
        k = k_all[:, lo:lo + dk]
        v = v_all[:, lo:lo + dk]

        # q @ k.T without materializing k.T: contract the last dims directly.
        scores = lax.dot_general(q, k, (((1,), (1,)), ((), ())),
                                 preferred_element_type=jnp.float32)   # (S, S)
        if has_mask:
            scores = scores + bias_ref[...]

        # Numerically stable softmax over the key axis; reciprocal on the EUP slot.
        m = jnp.max(scores, axis=-1, keepdims=True)
        e = jnp.exp(scores - m)
        p = e * pl.reciprocal(jnp.sum(e, axis=-1, keepdims=True), approx=True)

        ctx_parts.append(
            jnp.dot(p.astype(cdt), v, preferred_element_type=jnp.float32).astype(cdt))

    # One full-width (S,D)@(D,D) output projection instead of H small K=dk matmuls.
    ctx = jnp.concatenate(ctx_parts, axis=-1)                          # (S, D)
    o_ref[0] = jnp.dot(ctx, wo_ref[...],
                       preferred_element_type=jnp.float32).astype(o_ref.dtype)


def prepare_mha_params(wq, wk, wv, wo, heads, compute_dtype=jnp.bfloat16):
    """One-time layout + dtype prep (do this OUTSIDE the hot path).

    wq/wk/wv: (H, d_key, d_model) stacked per-head nn.Linear weights (out, in).
    wo:       (d_model, d_model)  nn.Linear weight (out, in).

    Returns (d_model, d_model) kernel-layout weights in compute_dtype:
      wq_t = concat_h(Wq_h).T * 1/sqrt(d_key)   (scale folded offline)
      wk_t / wv_t = concat_h(W{k,v}_h).T
      wo_t = Wo.T
    so that  x @ w_t  ==  F.linear(x, W_full)  (per-head columns [h*dk:(h+1)*dk]).
    """
    h_, d_key, d_model = wq.shape
    assert h_ == heads and heads * d_key == d_model
    scale = 1.0 / float(np.sqrt(d_key))
    wq_t = (wq.reshape(d_model, d_model).T * scale).astype(compute_dtype)
    wk_t = wk.reshape(d_model, d_model).T.astype(compute_dtype)
    wv_t = wv.reshape(d_model, d_model).T.astype(compute_dtype)
    wo_t = wo.T.astype(compute_dtype)
    return wq_t, wk_t, wv_t, wo_t


def multi_head_attention(queries, keys, values, wq_t, wk_t, wv_t, wo_t, heads,
                         mask=None, compute_dtype=jnp.bfloat16):
    """queries/keys/values: (B, S, D); weights from prepare_mha_params(); mask: (S, S) 0/1."""
    B, S, D = queries.shape
    assert D % heads == 0 and wq_t.shape == (D, D)
    out_dtype = queries.dtype

    xq = queries.astype(compute_dtype)
    xk = keys.astype(compute_dtype)
    xv = values.astype(compute_dtype)

    has_mask = mask is not None
    args = [xq, xk, xv, wq_t, wk_t, wv_t, wo_t]
    in_specs = [
        pl.BlockSpec((1, S, D), lambda b: (b, 0, 0)),   # queries
        pl.BlockSpec((1, S, D), lambda b: (b, 0, 0)),   # keys
        pl.BlockSpec((1, S, D), lambda b: (b, 0, 0)),   # values
        pl.BlockSpec((D, D), lambda b: (0, 0)),         # Wq.T * scale (resident)
        pl.BlockSpec((D, D), lambda b: (0, 0)),         # Wk.T         (resident)
        pl.BlockSpec((D, D), lambda b: (0, 0)),         # Wv.T         (resident)
        pl.BlockSpec((D, D), lambda b: (0, 0)),         # Wo.T         (resident)
    ]
    if has_mask:
        bias = jnp.where(mask == 0, _NEG_BIG, 0.0).astype(jnp.float32)
        assert bias.shape == (S, S)
        args.append(bias)
        in_specs.append(pl.BlockSpec((S, S), lambda b: (0, 0)))  # additive bias (resident)

    elt = jnp.dtype(compute_dtype).itemsize
    out_elt = jnp.dtype(out_dtype).itemsize
    flops = int(B * (8 * S * D * D + 4 * S * S * D))
    transcendentals = int(B * heads * S * S)
    bytes_accessed = int(3 * B * S * D * elt          # activations in
                         + 4 * D * D * elt            # weights (fetched once)
                         + (S * S * 4 if has_mask else 0)
                         + B * S * D * out_elt)       # output

    # Scoped-VMEM hint: resident weights + bias + double-buffered activation blocks
    # + in-kernel intermediates, with 2x headroom, clamped to v7x physical VMEM.
    working = (4 * D * D * elt + (S * S * 4 if has_mask else 0)
               + 2 * 3 * S * D * elt + 2 * S * D * out_elt
               + 4 * S * D * elt + 2 * S * S * 4)
    vmem_limit = int(min(64 * 1024 * 1024, max(2 * working, 32 * 1024 * 1024)))

    kernel = functools.partial(mha_kernel, heads=heads, has_mask=has_mask)

    out = pl.pallas_call(
        kernel,
        out_shape=jax.ShapeDtypeStruct((B, S, D), out_dtype),
        grid=(B,),
        in_specs=in_specs,
        out_specs=pl.BlockSpec((1, S, D), lambda b: (b, 0, 0)),
        compiler_params=pltpu.CompilerParams(
            dimension_semantics=("parallel",),
            vmem_limit_bytes=vmem_limit,
        ),
        cost_estimate=pl.CostEstimate(
            flops=flops,
            transcendentals=transcendentals,
            bytes_accessed=bytes_accessed,
        ),
    )(*args)
    return out


def init_mha_params(key, d_model, heads, dtype=jnp.float32):
    """Mirror nn.Linear default init (uniform +/- 1/sqrt(fan_in)), bias=False."""
    d_key = d_model // heads
    kq, kk, kv, ko = jax.random.split(key, 4)
    bound = 1.0 / np.sqrt(d_model)   # fan_in = d_model for Wq/Wk/Wv/Wo
    wq = jax.random.uniform(kq, (heads, d_key, d_model), dtype, -bound, bound)
    wk = jax.random.uniform(kk, (heads, d_key, d_model), dtype, -bound, bound)
    wv = jax.random.uniform(kv, (heads, d_key, d_model), dtype, -bound, bound)
    wo = jax.random.uniform(ko, (d_model, d_model), dtype, -bound, bound)
    return wq, wk, wv, wo


def mha_reference(xq, xk, xv, wq, wk, wv, wo, mask):
    """Plain-JAX f32 reference replicating the PyTorch module (inference path)."""
    H, d_key, _ = wq.shape
    head_outs = []
    for h in range(H):
        q = xq @ wq[h].T
        k = xk @ wk[h].T
        v = xv @ wv[h].T
        attn = jnp.einsum('bqd,bkd->bqk', q, k) / np.sqrt(d_key)
        if mask is not None:
            attn = jnp.where(mask == 0, -jnp.inf, attn)
        attn = jax.nn.softmax(attn, axis=-1)
        head_outs.append(jnp.einsum('bqk,bkd->bqd', attn, v))
    cat = jnp.concatenate(head_outs, axis=-1)
    return cat @ wo.T


if __name__ == "__main__":
    key = jax.random.PRNGKey(0)
    kq, kk, kv, kp = jax.random.split(key, 4)

    batch, seq, d_model, heads = 2, 8, 32, 4
    queries = jax.random.normal(kq, (batch, seq, d_model), jnp.float32)
    keys_in = jax.random.normal(kk, (batch, seq, d_model), jnp.float32)
    values_in = jax.random.normal(kv, (batch, seq, d_model), jnp.float32)

    wq, wk, wv, wo = init_mha_params(kp, d_model, heads)

    # Causal mask exercising the masked_fill path (shape (seq, seq), 0 => masked).
    mask = jnp.tril(jnp.ones((seq, seq), jnp.int32))

    # One-time weight layout / dtype prep (outside the hot path): bf16 + folded scale.
    wq_t, wk_t, wv_t, wo_t = prepare_mha_params(wq, wk, wv, wo, heads,
                                                compute_dtype=jnp.bfloat16)

    out = multi_head_attention(queries, keys_in, values_in,
                               wq_t, wk_t, wv_t, wo_t, heads,
                               mask=mask, compute_dtype=jnp.bfloat16)
    jax.block_until_ready(out)

    ref = mha_reference(queries, keys_in, values_in, wq, wk, wv, wo, mask)
    assert out.shape == (batch, seq, d_model)
    # bf16 operands -> relaxed tolerance against the f32 reference.
    err = float(jnp.max(jnp.abs(out.astype(jnp.float32) - ref)))
    assert err < 5e-2, err

    print("KERNEL_OK")
</pallas_src>

<mosaic_0001>
module attributes {stable_mosaic.version = 11 : i64} {
  func.func @mha_kernel(%arg0: i32, %arg1: memref<1x8x32xbf16, #tpu.memory_space<vmem>>, %arg2: memref<1x8x32xbf16, #tpu.memory_space<vmem>>, %arg3: memref<1x8x32xbf16, #tpu.memory_space<vmem>>, %arg4: memref<32x32xbf16, #tpu.memory_space<vmem>>, %arg5: memref<32x32xbf16, #tpu.memory_space<vmem>>, %arg6: memref<32x32xbf16, #tpu.memory_space<vmem>>, %arg7: memref<32x32xbf16, #tpu.memory_space<vmem>>, %arg8: memref<8x8xf32, #tpu.memory_space<vmem>>, %arg9: memref<1x8x32xf32, #tpu.memory_space<vmem>>) attributes {dimension_semantics = [#tpu.dimension_semantics<parallel>], iteration_bounds = array<i64: 2>, scalar_prefetch = 0 : i64, scratch_operands = 0 : i64, tpu.core_type = #tpu.core_type<tc>, window_params = [{transform_indices = @transform_0, window_bounds = array<i64: 1, 8, 32>}, {transform_indices = @transform_1, window_bounds = array<i64: 1, 8, 32>}, {transform_indices = @transform_2, window_bounds = array<i64: 1, 8, 32>}, {pipeline_mode = #tpu.pipeline_mode<synchronous>, transform_indices = @transform_3, window_bounds = array<i64: 32, 32>}, {pipeline_mode = #tpu.pipeline_mode<synchronous>, transform_indices = @transform_4, window_bounds = array<i64: 32, 32>}, {pipeline_mode = #tpu.pipeline_mode<synchronous>, transform_indices = @transform_5, window_bounds = array<i64: 32, 32>}, {pipeline_mode = #tpu.pipeline_mode<synchronous>, transform_indices = @transform_6, window_bounds = array<i64: 32, 32>}, {pipeline_mode = #tpu.pipeline_mode<synchronous>, transform_indices = @transform_7, window_bounds = array<i64: 8, 8>}, {transform_indices = @transform_8, window_bounds = array<i64: 1, 8, 32>}]} {
    %c0 = arith.constant 0 : index
    %c0_0 = arith.constant 0 : index
    %c0_1 = arith.constant 0 : index
    %0 = vector.load %arg1[%c0, %c0_0, %c0_1] : memref<1x8x32xbf16, #tpu.memory_space<vmem>>, vector<1x8x32xbf16>
    %1 = vector.shape_cast %0 : vector<1x8x32xbf16> to vector<8x32xbf16>
    %c0_2 = arith.constant 0 : index
    %c0_3 = arith.constant 0 : index
    %c0_4 = arith.constant 0 : index
    %2 = vector.load %arg2[%c0_2, %c0_3, %c0_4] : memref<1x8x32xbf16, #tpu.memory_space<vmem>>, vector<1x8x32xbf16>
    %3 = vector.shape_cast %2 : vector<1x8x32xbf16> to vector<8x32xbf16>
    %c0_5 = arith.constant 0 : index
    %c0_6 = arith.constant 0 : index
    %c0_7 = arith.constant 0 : index
    %4 = vector.load %arg3[%c0_5, %c0_6, %c0_7] : memref<1x8x32xbf16, #tpu.memory_space<vmem>>, vector<1x8x32xbf16>
    %5 = vector.shape_cast %4 : vector<1x8x32xbf16> to vector<8x32xbf16>
    %c0_8 = arith.constant 0 : index
    %c0_9 = arith.constant 0 : index
    %6 = vector.load %arg4[%c0_8, %c0_9] : memref<32x32xbf16, #tpu.memory_space<vmem>>, vector<32x32xbf16>
    %cst = arith.constant dense<0.000000e+00> : vector<8x32xf32>
    %7 = tpu.matmul %1, %6, %cst {dimension_numbers = #tpu.dot_dimension_numbers<[1], [0], [0], [1], [0, 0, 1, 1], [], []>} : vector<8x32xbf16>, vector<32x32xbf16>, vector<8x32xf32> -> vector<8x32xf32>
    %8 = arith.truncf %7 : vector<8x32xf32> to vector<8x32xbf16>
    %c0_10 = arith.constant 0 : index
    %c0_11 = arith.constant 0 : index
    %9 = vector.load %arg5[%c0_10, %c0_11] : memref<32x32xbf16, #tpu.memory_space<vmem>>, vector<32x32xbf16>
    %cst_12 = arith.constant dense<0.000000e+00> : vector<8x32xf32>
    %10 = tpu.matmul %3, %9, %cst_12 {dimension_numbers = #tpu.dot_dimension_numbers<[1], [0], [0], [1], [0, 0, 1, 1], [], []>} : vector<8x32xbf16>, vector<32x32xbf16>, vector<8x32xf32> -> vector<8x32xf32>
    %11 = arith.truncf %10 : vector<8x32xf32> to vector<8x32xbf16>
    %c0_13 = arith.constant 0 : index
    %c0_14 = arith.constant 0 : index
    %12 = vector.load %arg6[%c0_13, %c0_14] : memref<32x32xbf16, #tpu.memory_space<vmem>>, vector<32x32xbf16>
    %cst_15 = arith.constant dense<0.000000e+00> : vector<8x32xf32>
    %13 = tpu.matmul %5, %12, %cst_15 {dimension_numbers = #tpu.dot_dimension_numbers<[1], [0], [0], [1], [0, 0, 1, 1], [], []>} : vector<8x32xbf16>, vector<32x32xbf16>, vector<8x32xf32> -> vector<8x32xf32>
    %14 = arith.truncf %13 : vector<8x32xf32> to vector<8x32xbf16>
    %15 = vector.extract_strided_slice %8 {offsets = [0, 0], sizes = [8, 8], strides = [1, 1]} : vector<8x32xbf16> to vector<8x8xbf16>
    %16 = vector.extract_strided_slice %11 {offsets = [0, 0], sizes = [8, 8], strides = [1, 1]} : vector<8x32xbf16> to vector<8x8xbf16>
    %17 = vector.extract_strided_slice %14 {offsets = [0, 0], sizes = [8, 8], strides = [1, 1]} : vector<8x32xbf16> to vector<8x8xbf16>
    %cst_16 = arith.constant dense<0.000000e+00> : vector<8x8xf32>
    %18 = tpu.matmul %15, %16, %cst_16 {dimension_numbers = #tpu.dot_dimension_numbers<[1], [1], [0], [0], [0, 0, 1, 0], [], []>} : vector<8x8xbf16>, vector<8x8xbf16>, vector<8x8xf32> -> vector<8x8xf32>
    %c0_17 = arith.constant 0 : index
    %c0_18 = arith.constant 0 : index
    %19 = vector.load %arg8[%c0_17, %c0_18] : memref<8x8xf32, #tpu.memory_space<vmem>>, vector<8x8xf32>
    %20 = arith.addf %18, %19 : vector<8x8xf32>
    %cst_19 = arith.constant dense<0xFF800000> : vector<8xf32>
    %21 = vector.multi_reduction <maximumf>, %20, %cst_19 [1] : vector<8x8xf32> to vector<8xf32>
    %22 = vector.shape_cast %21 : vector<8xf32> to vector<8x1xf32>
    %23 = vector.broadcast %22 : vector<8x1xf32> to vector<8x8xf32>
    %24 = arith.subf %20, %23 : vector<8x8xf32>
    %25 = math.exp %24 : vector<8x8xf32>
    %cst_20 = arith.constant dense<0.000000e+00> : vector<8xf32>
    %26 = vector.multi_reduction <add>, %25, %cst_20 [1] : vector<8x8xf32> to vector<8xf32>
    %27 = vector.shape_cast %26 : vector<8xf32> to vector<8x1xf32>
    %28 = tpu.reciprocal %27 {approx = true} : vector<8x1xf32> -> vector<8x1xf32>
    %29 = vector.broadcast %28 : vector<8x1xf32> to vector<8x8xf32>
    %30 = arith.mulf %25, %29 : vector<8x8xf32>
    %31 = arith.truncf %30 : vector<8x8xf32> to vector<8x8xbf16>
    %cst_21 = arith.constant dense<0.000000e+00> : vector<8x8xf32>
    %32 = tpu.matmul %31, %17, %cst_21 {dimension_numbers = #tpu.dot_dimension_numbers<[1], [0], [0], [1], [0, 0, 1, 1], [], []>} : vector<8x8xbf16>, vector<8x8xbf16>, vector<8x8xf32> -> vector<8x8xf32>
    %33 = arith.truncf %32 : vector<8x8xf32> to vector<8x8xbf16>
    %34 = vector.extract_strided_slice %8 {offsets = [0, 8], sizes = [8, 8], strides = [1, 1]} : vector<8x32xbf16> to vector<8x8xbf16>
    %35 = vector.extract_strided_slice %11 {offsets = [0, 8], sizes = [8, 8], strides = [1, 1]} : vector<8x32xbf16> to vector<8x8xbf16>
    %36 = vector.extract_strided_slice %14 {offsets = [0, 8], sizes = [8, 8], strides = [1, 1]} : vector<8x32xbf16> to vector<8x8xbf16>
    %cst_22 = arith.constant dense<0.000000e+00> : vector<8x8xf32>
    %37 = tpu.matmul %34, %35, %cst_22 {dimension_numbers = #tpu.dot_dimension_numbers<[1], [1], [0], [0], [0, 0, 1, 0], [], []>} : vector<8x8xbf16>, vector<8x8xbf16>, vector<8x8xf32> -> vector<8x8xf32>
    %c0_23 = arith.constant 0 : index
    %c0_24 = arith.constant 0 : index
    %38 = vector.load %arg8[%c0_23, %c0_24] : memref<8x8xf32, #tpu.memory_space<vmem>>, vector<8x8xf32>
    %39 = arith.addf %37, %38 : vector<8x8xf32>
    %cst_25 = arith.constant dense<0xFF800000> : vector<8xf32>
    %40 = vector.multi_reduction <maximumf>, %39, %cst_25 [1] : vector<8x8xf32> to vector<8xf32>
    %41 = vector.shape_cast %40 : vector<8xf32> to vector<8x1xf32>
    %42 = vector.broadcast %41 : vector<8x1xf32> to vector<8x8xf32>
    %43 = arith.subf %39, %42 : vector<8x8xf32>
    %44 = math.exp %43 : vector<8x8xf32>
    %cst_26 = arith.constant dense<0.000000e+00> : vector<8xf32>
    %45 = vector.multi_reduction <add>, %44, %cst_26 [1] : vector<8x8xf32> to vector<8xf32>
    %46 = vector.shape_cast %45 : vector<8xf32> to vector<8x1xf32>
    %47 = tpu.reciprocal %46 {approx = true} : vector<8x1xf32> -> vector<8x1xf32>
    %48 = vector.broadcast %47 : vector<8x1xf32> to vector<8x8xf32>
    %49 = arith.mulf %44, %48 : vector<8x8xf32>
    %50 = arith.truncf %49 : vector<8x8xf32> to vector<8x8xbf16>
    %cst_27 = arith.constant dense<0.000000e+00> : vector<8x8xf32>
    %51 = tpu.matmul %50, %36, %cst_27 {dimension_numbers = #tpu.dot_dimension_numbers<[1], [0], [0], [1], [0, 0, 1, 1], [], []>} : vector<8x8xbf16>, vector<8x8xbf16>, vector<8x8xf32> -> vector<8x8xf32>
    %52 = arith.truncf %51 : vector<8x8xf32> to vector<8x8xbf16>
    %53 = vector.extract_strided_slice %8 {offsets = [0, 16], sizes = [8, 8], strides = [1, 1]} : vector<8x32xbf16> to vector<8x8xbf16>
    %54 = vector.extract_strided_slice %11 {offsets = [0, 16], sizes = [8, 8], strides = [1, 1]} : vector<8x32xbf16> to vector<8x8xbf16>
    %55 = vector.extract_strided_slice %14 {offsets = [0, 16], sizes = [8, 8], strides = [1, 1]} : vector<8x32xbf16> to vector<8x8xbf16>
    %cst_28 = arith.constant dense<0.000000e+00> : vector<8x8xf32>
    %56 = tpu.matmul %53, %54, %cst_28 {dimension_numbers = #tpu.dot_dimension_numbers<[1], [1], [0], [0], [0, 0, 1, 0], [], []>} : vector<8x8xbf16>, vector<8x8xbf16>, vector<8x8xf32> -> vector<8x8xf32>
    %c0_29 = arith.constant 0 : index
    %c0_30 = arith.constant 0 : index
    %57 = vector.load %arg8[%c0_29, %c0_30] : memref<8x8xf32, #tpu.memory_space<vmem>>, vector<8x8xf32>
    %58 = arith.addf %56, %57 : vector<8x8xf32>
    %cst_31 = arith.constant dense<0xFF800000> : vector<8xf32>
    %59 = vector.multi_reduction <maximumf>, %58, %cst_31 [1] : vector<8x8xf32> to vector<8xf32>
    %60 = vector.shape_cast %59 : vector<8xf32> to vector<8x1xf32>
    %61 = vector.broadcast %60 : vector<8x1xf32> to vector<8x8xf32>
    %62 = arith.subf %58, %61 : vector<8x8xf32>
    %63 = math.exp %62 : vector<8x8xf32>
    %cst_32 = arith.constant dense<0.000000e+00> : vector<8xf32>
    %64 = vector.multi_reduction <add>, %63, %cst_32 [1] : vector<8x8xf32> to vector<8xf32>
    %65 = vector.shape_cast %64 : vector<8xf32> to vector<8x1xf32>
    %66 = tpu.reciprocal %65 {approx = true} : vector<8x1xf32> -> vector<8x1xf32>
    %67 = vector.broadcast %66 : vector<8x1xf32> to vector<8x8xf32>
    %68 = arith.mulf %63, %67 : vector<8x8xf32>
    %69 = arith.truncf %68 : vector<8x8xf32> to vector<8x8xbf16>
    %cst_33 = arith.constant dense<0.000000e+00> : vector<8x8xf32>
    %70 = tpu.matmul %69, %55, %cst_33 {dimension_numbers = #tpu.dot_dimension_numbers<[1], [0], [0], [1], [0, 0, 1, 1], [], []>} : vector<8x8xbf16>, vector<8x8xbf16>, vector<8x8xf32> -> vector<8x8xf32>
    %71 = arith.truncf %70 : vector<8x8xf32> to vector<8x8xbf16>
    %72 = vector.extract_strided_slice %8 {offsets = [0, 24], sizes = [8, 8], strides = [1, 1]} : vector<8x32xbf16> to vector<8x8xbf16>
    %73 = vector.extract_strided_slice %11 {offsets = [0, 24], sizes = [8, 8], strides = [1, 1]} : vector<8x32xbf16> to vector<8x8xbf16>
    %74 = vector.extract_strided_slice %14 {offsets = [0, 24], sizes = [8, 8], strides = [1, 1]} : vector<8x32xbf16> to vector<8x8xbf16>
    %cst_34 = arith.constant dense<0.000000e+00> : vector<8x8xf32>
    %75 = tpu.matmul %72, %73, %cst_34 {dimension_numbers = #tpu.dot_dimension_numbers<[1], [1], [0], [0], [0, 0, 1, 0], [], []>} : vector<8x8xbf16>, vector<8x8xbf16>, vector<8x8xf32> -> vector<8x8xf32>
    %c0_35 = arith.constant 0 : index
    %c0_36 = arith.constant 0 : index
    %76 = vector.load %arg8[%c0_35, %c0_36] : memref<8x8xf32, #tpu.memory_space<vmem>>, vector<8x8xf32>
    %77 = arith.addf %75, %76 : vector<8x8xf32>
    %cst_37 = arith.constant dense<0xFF800000> : vector<8xf32>
    %78 = vector.multi_reduction <maximumf>, %77, %cst_37 [1] : vector<8x8xf32> to vector<8xf32>
    %79 = vector.shape_cast %78 : vector<8xf32> to vector<8x1xf32>
    %80 = vector.broadcast %79 : vector<8x1xf32> to vector<8x8xf32>
    %81 = arith.subf %77, %80 : vector<8x8xf32>
    %82 = math.exp %81 : vector<8x8xf32>
    %cst_38 = arith.constant dense<0.000000e+00> : vector<8xf32>
    %83 = vector.multi_reduction <add>, %82, %cst_38 [1] : vector<8x8xf32> to vector<8xf32>
    %84 = vector.shape_cast %83 : vector<8xf32> to vector<8x1xf32>
    %85 = tpu.reciprocal %84 {approx = true} : vector<8x1xf32> -> vector<8x1xf32>
    %86 = vector.broadcast %85 : vector<8x1xf32> to vector<8x8xf32>
    %87 = arith.mulf %82, %86 : vector<8x8xf32>
    %88 = arith.truncf %87 : vector<8x8xf32> to vector<8x8xbf16>
    %cst_39 = arith.constant dense<0.000000e+00> : vector<8x8xf32>
    %89 = tpu.matmul %88, %74, %cst_39 {dimension_numbers = #tpu.dot_dimension_numbers<[1], [0], [0], [1], [0, 0, 1, 1], [], []>} : vector<8x8xbf16>, vector<8x8xbf16>, vector<8x8xf32> -> vector<8x8xf32>
    %90 = arith.truncf %89 : vector<8x8xf32> to vector<8x8xbf16>
    %91 = tpu.concatenate %33, %52, %71, %90 in 1 : vector<8x8xbf16>, vector<8x8xbf16>, vector<8x8xbf16>, vector<8x8xbf16> -> vector<8x32xbf16>
    %c0_40 = arith.constant 0 : index
    %c0_41 = arith.constant 0 : index
    %92 = vector.load %arg7[%c0_40, %c0_41] : memref<32x32xbf16, #tpu.memory_space<vmem>>, vector<32x32xbf16>
    %cst_42 = arith.constant dense<0.000000e+00> : vector<8x32xf32>
    %93 = tpu.matmul %91, %92, %cst_42 {dimension_numbers = #tpu.dot_dimension_numbers<[1], [0], [0], [1], [0, 0, 1, 1], [], []>} : vector<8x32xbf16>, vector<32x32xbf16>, vector<8x32xf32> -> vector<8x32xf32>
    %c0_43 = arith.constant 0 : index
    %c0_44 = arith.constant 0 : index
    %c0_45 = arith.constant 0 : index
    %94 = vector.load %arg9[%c0_43, %c0_44, %c0_45] : memref<1x8x32xf32, #tpu.memory_space<vmem>>, vector<1x8x32xf32>
    %95 = vector.shape_cast %94 : vector<1x8x32xf32> to vector<8x32xf32>
    %96 = vector.shape_cast %93 : vector<8x32xf32> to vector<1x8x32xf32>
    tpu.vector_store %arg9[%c0_43, %c0_44, %c0_45], %96 {strides = array<i32>} : memref<1x8x32xf32, #tpu.memory_space<vmem>>, vector<1x8x32xf32>,
    return
  }
  func.func @transform_0(%arg0: i32) -> (i32, i32, i32) {
    %c0_i32 = arith.constant 0 : i32
    %c0_i32_0 = arith.constant 0 : i32
    %c0_i32_1 = arith.constant 0 : i32
    return %arg0, %c0_i32, %c0_i32_0 : i32, i32, i32
  }
  func.func @transform_1(%arg0: i32) -> (i32, i32, i32) {
    %c0_i32 = arith.constant 0 : i32
    %c0_i32_0 = arith.constant 0 : i32
    %c0_i32_1 = arith.constant 0 : i32
    return %arg0, %c0_i32, %c0_i32_0 : i32, i32, i32
  }
  func.func @transform_2(%arg0: i32) -> (i32, i32, i32) {
    %c0_i32 = arith.constant 0 : i32
    %c0_i32_0 = arith.constant 0 : i32
    %c0_i32_1 = arith.constant 0 : i32
    return %arg0, %c0_i32, %c0_i32_0 : i32, i32, i32
  }
  func.func @transform_3(%arg0: i32) -> (i32, i32) {
    %c0_i32 = arith.constant 0 : i32
    %c0_i32_0 = arith.constant 0 : i32
    %c0_i32_1 = arith.constant 0 : i32
    return %c0_i32, %c0_i32_0 : i32, i32
  }
  func.func @transform_4(%arg0: i32) -> (i32, i32) {
    %c0_i32 = arith.constant 0 : i32
    %c0_i32_0 = arith.constant 0 : i32
    %c0_i32_1 = arith.constant 0 : i32
    return %c0_i32, %c0_i32_0 : i32, i32
  }
  func.func @transform_5(%arg0: i32) -> (i32, i32) {
    %c0_i32 = arith.constant 0 : i32
    %c0_i32_0 = arith.constant 0 : i32
    %c0_i32_1 = arith.constant 0 : i32
    return %c0_i32, %c0_i32_0 : i32, i32
  }
  func.func @transform_6(%arg0: i32) -> (i32, i32) {
    %c0_i32 = arith.constant 0 : i32
    %c0_i32_0 = arith.constant 0 : i32
    %c0_i32_1 = arith.constant 0 : i32
    return %c0_i32, %c0_i32_0 : i32, i32
  }
  func.func @transform_7(%arg0: i32) -> (i32, i32) {
    %c0_i32 = arith.constant 0 : i32
    %c0_i32_0 = arith.constant 0 : i32
    %c0_i32_1 = arith.constant 0 : i32
    return %c0_i32, %c0_i32_0 : i32, i32
  }
  func.func @transform_8(%arg0: i32) -> (i32, i32, i32) {
    %c0_i32 = arith.constant 0 : i32
    %c0_i32_0 = arith.constant 0 : i32
    %c0_i32_1 = arith.constant 0 : i32
    return %arg0, %c0_i32, %c0_i32_0 : i32, i32, i32
  }
}

</mosaic_0001>

<llo_original>
// kernel: tpu_custom_call.1
$region0: #{tpu_custom_call.1}
  #allocation0 [shape = 'u32[]', space=smem, size = 0x4, offset = 0x4, fixed_abs, tag = 'smem constant byte address 0x4 - core index']
  #allocation1 [shape = 'u32[144,128]{1,0:T(1,128)}', space=vmem, size = 0x12000, scoped, tag = 'internal scratch']
  %s0 = inlined_call_operand.hbm [shape: bf16[2,8,32], index: 0, kind: input, shape index: {}]
  %s1 = inlined_call_operand.hbm [shape: bf16[2,8,32], index: 1, kind: input, shape index: {}]
  %s2 = inlined_call_operand.hbm [shape: bf16[2,8,32], index: 2, kind: input, shape index: {}]
  %s3 = inlined_call_operand.hbm [shape: bf16[32,32], index: 3, kind: input, shape index: {}]
  %s4 = inlined_call_operand.hbm [shape: bf16[32,32], index: 4, kind: input, shape index: {}]
  %s5 = inlined_call_operand.hbm [shape: bf16[32,32], index: 5, kind: input, shape index: {}]
  %s6 = inlined_call_operand.hbm [shape: bf16[32,32], index: 6, kind: input, shape index: {}]
  %s7 = inlined_call_operand.vmem [shape: f32[8,8], index: 7, kind: input, shape index: {}]
  %s8 = inlined_call_operand.hbm [shape: f32[2,8,32], index: 8, kind: output, shape index: {}]
  %s9 = sld [smem:[#allocation0]]
  $region93: #{tpu_custom_call.1} parent=0
    _
  %s11 = ssub.s32 1, %s9
  %s12 = scalar_select 0, %s11, %s9
  $region1: #{tpu_custom_call.1} parent=0
    #allocation2 [shape = 'u8[4096]{0}', space=vmem, size = 0x1000, scoped, tag = 'input window, operand 0']
    #allocation3 [shape = 's32[2]{0}', space=sflag, size = 0x8, scoped, tag = 'scoped memory for tpu_custom_call.1']
    #allocation4 [shape = 's32[2]{0}', space=sflag, size = 0x8, scoped, tag = 'scoped memory for tpu_custom_call.1']
    #allocation5 [shape = 'u8[4096]{0}', space=vmem, size = 0x1000, scoped, tag = 'input window, operand 1']
    #allocation6 [shape = 's32[2]{0}', space=sflag, size = 0x8, scoped, tag = 'scoped memory for tpu_custom_call.1']
    #allocation7 [shape = 'u8[4096]{0}', space=vmem, size = 0x1000, scoped, tag = 'input window, operand 2']
    #allocation8 [shape = 'u8[8192]{0}', space=vmem, size = 0x2000, scoped, tag = 'input window, operand 3, single buffered']
    #allocation9 [shape = 's32[1]{0}', space=sflag, size = 0x4, scoped, tag = 'scoped memory for tpu_custom_call.1']
    #allocation10 [shape = 'u8[8192]{0}', space=vmem, size = 0x2000, scoped, tag = 'input window, operand 4, single buffered']
    #allocation11 [shape = 'u8[8192]{0}', space=vmem, size = 0x2000, scoped, tag = 'input window, operand 5, single buffered']
    #allocation12 [shape = 's32[1]{0}', space=sflag, size = 0x4, scoped, tag = 'scoped memory for tpu_custom_call.1']
    #allocation13 [shape = 'u8[8192]{0}', space=vmem, size = 0x2000, scoped, tag = 'input window, operand 6, single buffered']
    #allocation14 [shape = 'u8[8192]{0}', space=vmem, size = 0x2000, scoped, tag = 'output window, operand 0']
    %13 = vsyncpa [#allocation3], 0
    %s14 = scalar_lea.sflag [#allocation3], 1
    %15 = vsyncpa %s14, 0
    %16 = vsyncpa [#allocation6], 0
    %s17 = scalar_lea.sflag [#allocation6], 1
    %18 = vsyncpa %s17, 0
    %19 = vsyncpa [#allocation9], 0
    %20 = vsyncpa [#allocation12], 0
    %21 = vsyncpa [#allocation4], 0
    %s22 = scalar_lea.sflag [#allocation4], 1
    %23 = vsyncpa %s22, 0
    loop: start=0, step=1, limit=4
    $region2: #{tpu_custom_call.1} parent=1 // loop_pre_header
      _
    $region3: #{tpu_custom_call.1} parent=1 // loop_header
      %s25 = sphi 0, %s29
      %p26 = scmp.ge.s32.totalorder %s25, 4
      %s35 = sphi 0, %s37
      %s38 = sphi 0, %s35
      %s39 = sphi 0, %s38
      %s55 = sphi 0, %s39
      %s61 = sphi 0, %s63
      %s64 = sphi 0, %s61
      %s65 = sphi 0, %s64
      %s81 = sphi 0, %s65
      %s87 = sphi 0, %s89
      %s90 = sphi 0, %s87
      %s91 = sphi 0, %s90
      %s107 = sphi 0, %s91
      %s111 = sphi 0, %s111
      %s113 = sphi 0, %s111
      %s114 = sphi 0, %s113
      %s128 = sphi 0, %s114
      %s132 = sphi 0, %s132
      %s134 = sphi 0, %s132
      %s135 = sphi 0, %s134
      %s149 = sphi 0, %s135
      %s153 = sphi 0, %s153
      %s155 = sphi 0, %s153
      %s156 = sphi 0, %s155
      %s170 = sphi 0, %s156
      %s174 = sphi 0, %s174
      %s176 = sphi 0, %s174
      %s177 = sphi 0, %s176
      %s191 = sphi 0, %s177
      %s195 = sphi 0, %s195
      %s197 = sphi 0, %s195
      %s198 = sphi 0, %s197
      %s212 = sphi 0, %s198
      %s218 = sphi 0, %s220
      %s221 = sphi 0, %s218
      %s222 = sphi 0, %s221
      %s238 = sphi 0, %s222
    $region4: #{tpu_custom_call.1} parent=1 // loop_header_branch
      %28 = sbr.rel (%p26) target = $region8
    $region5: #{tpu_custom_call.1} parent=1 // loop_body
      %s30 = ssub.s32 %s25, 1
      %s31 = ssub.s32 %s25, 2
      %s32 = sadd.s32 %s25, 1
      %s33 = ssub.s32 %s25, %s32
      %p34 = scmp.eq.s32.totalorder %s33, 0
      %s36 = sadd.s32 %s35, 1
      %s37 = scalar_select %p34, %s35, %s36
      %p40 = pneg %p34
      %p41 = scmp.eq.s32.totalorder %s25, 1
      %p42 = por %p40, %p41
      %p43 = scmp.ne.s32.totalorder %s35, %s38
      %p44 = scmp.eq.s32.totalorder %s25, 0
      %p45 = por %p43, %p44
      %p46 = scmp.ne.s32.totalorder %s35, %s38
      %p47 = scmp.eq.s32.totalorder %s30, 1
      %p48 = por %p46, %p47
      %p49 = scmp.ne.s32.totalorder %s38, %s39
      %p50 = scmp.eq.s32.totalorder %s30, 0
      %p51 = por %p49, %p50
      %p52 = scmp.ne.s32.totalorder %s38, %s39
      %p53 = scmp.eq.s32.totalorder %s31, 1
      %p54 = por %p52, %p53
      %p56 = scmp.ne.s32.totalorder %s39, %s55
      %p57 = scmp.eq.s32.totalorder %s31, 0
      %p58 = por %p56, %p57
      %s59 = ssub.s32 %s25, %s32
      %p60 = scmp.eq.s32.totalorder %s59, 0
      %s62 = sadd.s32 %s61, 1
      %s63 = scalar_select %p60, %s61, %s62
      %p66 = pneg %p60
      %p67 = scmp.eq.s32.totalorder %s25, 1
      %p68 = por %p66, %p67
      %p69 = scmp.ne.s32.totalorder %s61, %s64
      %p70 = scmp.eq.s32.totalorder %s25, 0
      %p71 = por %p69, %p70
      %p72 = scmp.ne.s32.totalorder %s61, %s64
      %p73 = scmp.eq.s32.totalorder %s30, 1
      %p74 = por %p72, %p73
      %p75 = scmp.ne.s32.totalorder %s64, %s65
      %p76 = scmp.eq.s32.totalorder %s30, 0
      %p77 = por %p75, %p76
      %p78 = scmp.ne.s32.totalorder %s64, %s65
      %p79 = scmp.eq.s32.totalorder %s31, 1
      %p80 = por %p78, %p79
      %p82 = scmp.ne.s32.totalorder %s65, %s81
      %p83 = scmp.eq.s32.totalorder %s31, 0
      %p84 = por %p82, %p83
      %s85 = ssub.s32 %s25, %s32
      %p86 = scmp.eq.s32.totalorder %s85, 0
      %s88 = sadd.s32 %s87, 1
      %s89 = scalar_select %p86, %s87, %s88
      %p92 = pneg %p86
      %p93 = scmp.eq.s32.totalorder %s25, 1
      %p94 = por %p92, %p93
      %p95 = scmp.ne.s32.totalorder %s87, %s90
      %p96 = scmp.eq.s32.totalorder %s25, 0
      %p97 = por %p95, %p96
      %p98 = scmp.ne.s32.totalorder %s87, %s90
      %p99 = scmp.eq.s32.totalorder %s30, 1
      %p100 = por %p98, %p99
      %p101 = scmp.ne.s32.totalorder %s90, %s91
      %p102 = scmp.eq.s32.totalorder %s30, 0
      %p103 = por %p101, %p102
      %p104 = scmp.ne.s32.totalorder %s90, %s91
      %p105 = scmp.eq.s32.totalorder %s31, 1
      %p106 = por %p104, %p105
      %p108 = scmp.ne.s32.totalorder %s91, %s107
      %p109 = scmp.eq.s32.totalorder %s31, 0
      %p110 = por %p108, %p109
      %s112 = sadd.s32 %s111, 1
      %p115 = scmp.eq.s32.totalorder %s25, 1
      %p116 = scmp.ne.s32.totalorder %s111, %s113
      %p117 = scmp.eq.s32.totalorder %s25, 0
      %p118 = por %p116, %p117
      %p119 = scmp.ne.s32.totalorder %s111, %s113
      %p120 = scmp.eq.s32.totalorder %s30, 1
      %p121 = por %p119, %p120
      %p122 = scmp.ne.s32.totalorder %s113, %s114
      %p123 = scmp.eq.s32.totalorder %s30, 0
      %p124 = por %p122, %p123
      %p125 = scmp.ne.s32.totalorder %s113, %s114
      %p126 = scmp.eq.s32.totalorder %s31, 1
      %p127 = por %p125, %p126
      %p129 = scmp.ne.s32.totalorder %s114, %s128
      %p130 = scmp.eq.s32.totalorder %s31, 0
      %p131 = por %p129, %p130
      %s133 = sadd.s32 %s132, 1
      %p136 = scmp.eq.s32.totalorder %s25, 1
      %p137 = scmp.ne.s32.totalorder %s132, %s134
      %p138 = scmp.eq.s32.totalorder %s25, 0
      %p139 = por %p137, %p138
      %p140 = scmp.ne.s32.totalorder %s132, %s134
      %p141 = scmp.eq.s32.totalorder %s30, 1
      %p142 = por %p140, %p141
      %p143 = scmp.ne.s32.totalorder %s134, %s135
      %p144 = scmp.eq.s32.totalorder %s30, 0
      %p145 = por %p143, %p144
      %p146 = scmp.ne.s32.totalorder %s134, %s135
      %p147 = scmp.eq.s32.totalorder %s31, 1
      %p148 = por %p146, %p147
      %p150 = scmp.ne.s32.totalorder %s135, %s149
      %p151 = scmp.eq.s32.totalorder %s31, 0
      %p152 = por %p150, %p151
      %s154 = sadd.s32 %s153, 1
      %p157 = scmp.eq.s32.totalorder %s25, 1
      %p158 = scmp.ne.s32.totalorder %s153, %s155
      %p159 = scmp.eq.s32.totalorder %s25, 0
      %p160 = por %p158, %p159
      %p161 = scmp.ne.s32.totalorder %s153, %s155
      %p162 = scmp.eq.s32.totalorder %s30, 1
      %p163 = por %p161, %p162
      %p164 = scmp.ne.s32.totalorder %s155, %s156
      %p165 = scmp.eq.s32.totalorder %s30, 0
      %p166 = por %p164, %p165
      %p167 = scmp.ne.s32.totalorder %s155, %s156
      %p168 = scmp.eq.s32.totalorder %s31, 1
      %p169 = por %p167, %p168
      %p171 = scmp.ne.s32.totalorder %s156, %s170
      %p172 = scmp.eq.s32.totalorder %s31, 0
      %p173 = por %p171, %p172
      %s175 = sadd.s32 %s174, 1
      %p178 = scmp.eq.s32.totalorder %s25, 1
      %p179 = scmp.ne.s32.totalorder %s174, %s176
      %p180 = scmp.eq.s32.totalorder %s25, 0
      %p181 = por %p179, %p180
      %p182 = scmp.ne.s32.totalorder %s174, %s176
      %p183 = scmp.eq.s32.totalorder %s30, 1
      %p184 = por %p182, %p183
      %p185 = scmp.ne.s32.totalorder %s176, %s177
      %p186 = scmp.eq.s32.totalorder %s30, 0
      %p187 = por %p185, %p186
      %p188 = scmp.ne.s32.totalorder %s176, %s177
      %p189 = scmp.eq.s32.totalorder %s31, 1
      %p190 = por %p188, %p189
      %p192 = scmp.ne.s32.totalorder %s177, %s191
      %p193 = scmp.eq.s32.totalorder %s31, 0
      %p194 = por %p192, %p193
      %s196 = sadd.s32 %s195, 1
      %p199 = scmp.eq.s32.totalorder %s25, 1
      %p200 = scmp.ne.s32.totalorder %s195, %s197
      %p201 = scmp.eq.s32.totalorder %s25, 0
      %p202 = por %p200, %p201
      %p203 = scmp.ne.s32.totalorder %s195, %s197
      %p204 = scmp.eq.s32.totalorder %s30, 1
      %p205 = por %p203, %p204
      %p206 = scmp.ne.s32.totalorder %s197, %s198
      %p207 = scmp.eq.s32.totalorder %s30, 0
      %p208 = por %p206, %p207
      %p209 = scmp.ne.s32.totalorder %s197, %s198
      %p210 = scmp.eq.s32.totalorder %s31, 1
      %p211 = por %p209, %p210
      %p213 = scmp.ne.s32.totalorder %s198, %s212
      %p214 = scmp.eq.s32.totalorder %s31, 0
      %p215 = por %p213, %p214
      %s216 = ssub.s32 %s25, %s32
      %p217 = scmp.eq.s32.totalorder %s216, 0
      %s219 = sadd.s32 %s218, 1
      %s220 = scalar_select %p217, %s218, %s219
      %p223 = pneg %p217
      %p224 = scmp.eq.s32.totalorder %s25, 1
      %p225 = por %p223, %p224
      %p226 = scmp.ne.s32.totalorder %s218, %s221
      %p227 = scmp.eq.s32.totalorder %s25, 0
      %p228 = por %p226, %p227
      %p229 = scmp.ne.s32.totalorder %s218, %s221
      %p230 = scmp.eq.s32.totalorder %s30, 1
      %p231 = por %p229, %p230
      %p232 = scmp.ne.s32.totalorder %s221, %s222
      %p233 = scmp.eq.s32.totalorder %s30, 0
      %p234 = por %p232, %p233
      %p235 = scmp.ne.s32.totalorder %s221, %s222
      %p236 = scmp.eq.s32.totalorder %s31, 1
      %p237 = por %p235, %p236
      %p239 = scmp.ne.s32.totalorder %s222, %s238
      %p240 = scmp.eq.s32.totalorder %s31, 0
      %p241 = por %p239, %p240
      %p242 = scmp.le.s32.totalorder 1, %s25
      %p243 = scmp.lt.s32.totalorder %s25, 3
      %p244 = pnand %p242, %p243
      %p245 = pneg %p244
      // Predicated region
      $region9: #{tpu_custom_call.1} parent=5 // pred_check
        _
      $region10: #{tpu_custom_call.1} parent=5 // pred_check_branch
        %247 = sbr.rel (%p244) target = $region12
      $region11: #{tpu_custom_call.1} parent=5 // pred_region
        %s248 = ssub.s32 %s25, 1
        // Predicated region
        $region13: #{tpu_custom_call.1} parent=11 // pred_check
          %p249 = pneg %p124
        $region14: #{tpu_custom_call.1} parent=11 // pred_check_branch
          %251 = sbr.rel (%p249) target = $region16
        $region15: #{tpu_custom_call.1} parent=11 // pred_region
          %s253 = ssub.s32 256, 256
          %254 = vsyncadd [#allocation9], %s253
          %s255 = sshll.u32 [#allocation8], 4
          %s256 = int_to_ptr.vmem [resolvable:$true] %s255
          %261 = dma.hbm_to_vmem [thread:$0]  %s3, 256, %s256, [#allocation9], 64, 64, 4
        $region16: #{tpu_custom_call.1} parent=11 // pred_fallthru
          _
        // Predicated region
        $region17: #{tpu_custom_call.1} parent=11 // pred_check
          %p262 = pneg %p145
        $region18: #{tpu_custom_call.1} parent=11 // pred_check_branch
          %264 = sbr.rel (%p262) target = $region20
        $region19: #{tpu_custom_call.1} parent=11 // pred_region
          %s266 = ssub.s32 256, 256
          %267 = vsyncadd [#allocation9], %s266
          %s268 = sshll.u32 [#allocation10], 4
          %s269 = int_to_ptr.vmem [resolvable:$true] %s268
          %274 = dma.hbm_to_vmem [thread:$0]  %s4, 256, %s269, [#allocation9], 64, 64, 4
        $region20: #{tpu_custom_call.1} parent=11 // pred_fallthru
          _
        // Predicated region
        $region21: #{tpu_custom_call.1} parent=11 // pred_check
          %p275 = pneg %p166
        $region22: #{tpu_custom_call.1} parent=11 // pred_check_branch
          %277 = sbr.rel (%p275) target = $region24
        $region23: #{tpu_custom_call.1} parent=11 // pred_region
          %s279 = ssub.s32 256, 256
          %280 = vsyncadd [#allocation12], %s279
          %s281 = sshll.u32 [#allocation11], 4
          %s282 = int_to_ptr.vmem [resolvable:$true] %s281
          %287 = dma.hbm_to_vmem [thread:$0]  %s5, 256, %s282, [#allocation12], 64, 64, 4
        $region24: #{tpu_custom_call.1} parent=11 // pred_fallthru
          _
        // Predicated region
        $region25: #{tpu_custom_call.1} parent=11 // pred_check
          %p288 = pneg %p187
        $region26: #{tpu_custom_call.1} parent=11 // pred_check_branch
          %290 = sbr.rel (%p288) target = $region28
        $region27: #{tpu_custom_call.1} parent=11 // pred_region
          %s292 = ssub.s32 256, 256
          %293 = vsyncadd [#allocation12], %s292
          %s294 = sshll.u32 [#allocation13], 4
          %s295 = int_to_ptr.vmem [resolvable:$true] %s294
          %300 = dma.hbm_to_vmem [thread:$0]  %s6, 256, %s295, [#allocation12], 64, 64, 4
        $region28: #{tpu_custom_call.1} parent=11 // pred_fallthru
          _
        // Predicated region
        $region29: #{tpu_custom_call.1} parent=11 // pred_check
          %p301 = pneg %p208
        $region30: #{tpu_custom_call.1} parent=11 // pred_check_branch
          %303 = sbr.rel (%p301) target = $region32
        $region31: #{tpu_custom_call.1} parent=11 // pred_region
          _
        $region32: #{tpu_custom_call.1} parent=11 // pred_fallthru
          _
      $region12: #{tpu_custom_call.1} parent=5 // pred_fallthru
        _
      %p304 = scmp.lt.s32.totalorder %s25, 2
      // Predicated region
      $region33: #{tpu_custom_call.1} parent=5 // pred_check
        %p305 = pneg %p304
      $region34: #{tpu_custom_call.1} parent=5 // pred_check_branch
        %307 = sbr.rel (%p305) target = $region36
      $region35: #{tpu_custom_call.1} parent=5 // pred_region
        // Predicated region
        $region37: #{tpu_custom_call.1} parent=35 // pred_check
          %p308 = pneg %p45
        $region38: #{tpu_custom_call.1} parent=35 // pred_check_branch
          %310 = sbr.rel (%p308) target = $region40
        $region39: #{tpu_custom_call.1} parent=35 // pred_region
          %s311 = sand.u32 %s35, 1
          %s312 = scalar_lea.sflag [#allocation3], %s311
          %s313 = sand.u32 %s35, 1
          %s314 = smul.addr %s313, 4
          %s315 = scalar_lea.vmem [#allocation2], %s314
          %s317 = ssub.s32 64, 64
          %318 = vsyncadd %s312, %s317
          %s319 = smul.addr %s25, 64
          %s320 = scalar_lea.hbm %s0, %s319
          %s322 = sshll.u32 %s315, 4
          %s323 = int_to_ptr.vmem [resolvable:$true] %s322
          %325 = dma.hbm_to_vmem [thread:$0]  %s320, 64, %s323, %s312
        $region40: #{tpu_custom_call.1} parent=35 // pred_fallthru
          _
        // Predicated region
        $region41: #{tpu_custom_call.1} parent=35 // pred_check
          %p326 = pneg %p71
        $region42: #{tpu_custom_call.1} parent=35 // pred_check_branch
          %328 = sbr.rel (%p326) target = $region44
        $region43: #{tpu_custom_call.1} parent=35 // pred_region
          %s329 = sand.u32 %s25, 1
          %s330 = scalar_lea.sflag [#allocation6], %s329
          %s331 = sand.u32 %s61, 1
          %s332 = smul.addr %s331, 4
          %s333 = scalar_lea.vmem [#allocation5], %s332
          %s335 = ssub.s32 64, 64
          %336 = vsyncadd %s330, %s335
          %s337 = smul.addr %s25, 64
          %s338 = scalar_lea.hbm %s1, %s337
          %s340 = sshll.u32 %s333, 4
          %s341 = int_to_ptr.vmem [resolvable:$true] %s340
          %343 = dma.hbm_to_vmem [thread:$0]  %s338, 64, %s341, %s330
        $region44: #{tpu_custom_call.1} parent=35 // pred_fallthru
          _
        // Predicated region
        $region45: #{tpu_custom_call.1} parent=35 // pred_check
          %p344 = pneg %p97
        $region46: #{tpu_custom_call.1} parent=35 // pred_check_branch
          %346 = sbr.rel (%p344) target = $region48
        $region47: #{tpu_custom_call.1} parent=35 // pred_region
          %s347 = sand.u32 %s25, 1
          %s348 = scalar_lea.sflag [#allocation6], %s347
          %s349 = sand.u32 %s87, 1
          %s350 = smul.addr %s349, 4
          %s351 = scalar_lea.vmem [#allocation7], %s350
          %s353 = ssub.s32 64, 64
          %354 = vsyncadd %s348, %s353
          %s355 = smul.addr %s25, 64
          %s356 = scalar_lea.hbm %s2, %s355
          %s358 = sshll.u32 %s351, 4
          %s359 = int_to_ptr.vmem [resolvable:$true] %s358
          %361 = dma.hbm_to_vmem [thread:$0]  %s356, 64, %s359, %s348
        $region48: #{tpu_custom_call.1} parent=35 // pred_fallthru
          _
      $region36: #{tpu_custom_call.1} parent=5 // pred_fallthru
        _
      %p362 = scmp.le.s32.totalorder 1, %s25
      %p363 = scmp.lt.s32.totalorder %s25, 3
      %p364 = pnand %p362, %p363
      %p365 = pneg %p364
      // Predicated region
      $region49: #{tpu_custom_call.1} parent=5 // pred_check
        _
      $region50: #{tpu_custom_call.1} parent=5 // pred_check_branch
        %367 = sbr.rel (%p364) target = $region52
      $region51: #{tpu_custom_call.1} parent=5 // pred_region
        %s368 = ssub.s32 %s25, 1
        %s369 = sand.u32 %s38, 1
        %s370 = scalar_lea.sflag [#allocation3], %s369
        %s371 = sand.u32 %s38, 1
        %s372 = smul.addr %s371, 4
        %s373 = scalar_lea.vmem [#allocation2], %s372
        // Predicated region
        $region53: #{tpu_custom_call.1} parent=51 // pred_check
          %p374 = pneg %p51
        $region54: #{tpu_custom_call.1} parent=51 // pred_check_branch
          %376 = sbr.rel (%p374) target = $region56
        $region55: #{tpu_custom_call.1} parent=51 // pred_region
          %377 = dma.done %s370, 64
        $region56: #{tpu_custom_call.1} parent=51 // pred_fallthru
          _
        %s378 = sand.u32 %s30, 1
        %s379 = scalar_lea.sflag [#allocation6], %s378
        %s380 = sand.u32 %s64, 1
        %s381 = smul.addr %s380, 4
        %s382 = scalar_lea.vmem [#allocation5], %s381
        // Predicated region
        $region57: #{tpu_custom_call.1} parent=51 // pred_check
          %p383 = pneg %p77
        $region58: #{tpu_custom_call.1} parent=51 // pred_check_branch
          %385 = sbr.rel (%p383) target = $region60
        $region59: #{tpu_custom_call.1} parent=51 // pred_region
          %386 = dma.done %s379, 64
        $region60: #{tpu_custom_call.1} parent=51 // pred_fallthru
          _
        %s387 = sand.u32 %s30, 1
        %s388 = scalar_lea.sflag [#allocation6], %s387
        %s389 = sand.u32 %s90, 1
        %s390 = smul.addr %s389, 4
        %s391 = scalar_lea.vmem [#allocation7], %s390
        // Predicated region
        $region61: #{tpu_custom_call.1} parent=51 // pred_check
          %p392 = pneg %p103
        $region62: #{tpu_custom_call.1} parent=51 // pred_check_branch
          %394 = sbr.rel (%p392) target = $region64
        $region63: #{tpu_custom_call.1} parent=51 // pred_region
          %395 = dma.done %s388, 64
        $region64: #{tpu_custom_call.1} parent=51 // pred_fallthru
          _
        // Predicated region
        $region65: #{tpu_custom_call.1} parent=51 // pred_check
          %p396 = pneg %p124
        $region66: #{tpu_custom_call.1} parent=51 // pred_check_branch
          %398 = sbr.rel (%p396) target = $region68
        $region67: #{tpu_custom_call.1} parent=51 // pred_region
          %399 = dma.done [#allocation9], 256
        $region68: #{tpu_custom_call.1} parent=51 // pred_fallthru
          _
        // Predicated region
        $region69: #{tpu_custom_call.1} parent=51 // pred_check
          %p400 = pneg %p145
        $region70: #{tpu_custom_call.1} parent=51 // pred_check_branch
          %402 = sbr.rel (%p400) target = $region72
        $region71: #{tpu_custom_call.1} parent=51 // pred_region
          %403 = dma.done [#allocation9], 256
        $region72: #{tpu_custom_call.1} parent=51 // pred_fallthru
          _
        // Predicated region
        $region73: #{tpu_custom_call.1} parent=51 // pred_check
          %p404 = pneg %p166
        $region74: #{tpu_custom_call.1} parent=51 // pred_check_branch
          %406 = sbr.rel (%p404) target = $region76
        $region75: #{tpu_custom_call.1} parent=51 // pred_region
          %407 = dma.done [#allocation12], 256
        $region76: #{tpu_custom_call.1} parent=51 // pred_fallthru
          _
        // Predicated region
        $region77: #{tpu_custom_call.1} parent=51 // pred_check
          %p408 = pneg %p187
        $region78: #{tpu_custom_call.1} parent=51 // pred_check_branch
          %410 = sbr.rel (%p408) target = $region80
        $region79: #{tpu_custom_call.1} parent=51 // pred_region
          %411 = dma.done [#allocation12], 256
        $region80: #{tpu_custom_call.1} parent=51 // pred_fallthru
          _
        %s412 = sand.u32 %s38, 1
        %s413 = scalar_lea.sflag [#allocation3], %s412
        %s414 = sand.u32 %s38, 1
        %s415 = smul.addr %s414, 4
        %s416 = scalar_lea.vmem [#allocation2], %s415
        %p417 = pneg %p51
        %p418 = pneg %p48
        %s419 = sand.u32 %s30, 1
        %s420 = scalar_lea.sflag [#allocation6], %s419
        %s421 = sand.u32 %s64, 1
        %s422 = smul.addr %s421, 4
        %s423 = scalar_lea.vmem [#allocation5], %s422
        %p424 = pneg %p77
        %p425 = pneg %p74
        %s426 = sand.u32 %s30, 1
        %s427 = scalar_lea.sflag [#allocation6], %s426
        %s428 = sand.u32 %s90, 1
        %s429 = smul.addr %s428, 4
        %s430 = scalar_lea.vmem [#allocation7], %s429
        %p431 = pneg %p103
        %p432 = pneg %p100
        %p433 = pneg %p124
        %p434 = pneg %p121
        %p435 = pneg %p145
        %p436 = pneg %p142
        %p437 = pneg %p166
        %p438 = pneg %p163
        %p439 = pneg %p187
        %p440 = pneg %p184
        %p441 = pneg %p208
        %p442 = pneg %p205
        %p443 = pneg %p234
        %p444 = pneg %p231
        %s445 = sand.u32 %s221, 1
        %s446 = scalar_lea.sflag [#allocation4], %s445
        %s447 = sand.u32 %s221, 1
        %s448 = smul.addr %s447, 8
        %s449 = scalar_lea.vmem [#allocation14], %s448
        %v451 = vld [vmem:[%s373] sm:$0xf]
        %v452 = vld [vmem:[%s382] sm:$0xf]
        %v453 = vld [vmem:[%s391] sm:$0xf]
        %v454 = vld [vmem:[#allocation8] sm:$0xf]
        %v455 = vld [vmem:[#allocation8 + $0x4] sm:$0xf]
        %v456 = vld [vmem:[#allocation8 + $0x8] sm:$0xf]
        %v457 = vld [vmem:[#allocation8 + $0xc] sm:$0xf]
        %v462 = vunpack.c.l.b16 %v454
        %v463 = vunpack.c.l.b16 %v455
        %v464 = vunpack.c.l.b16 %v456
        %v465 = vunpack.c.l.b16 %v457
        %v466 = vpack.c.b16 %v463, %v462
        %v467 = vpack.c.b16 %v465, %v464
        %vm470 = vcmask 261120
        %v472 = vsel %vm470, %v451, 0
        %474 = vmatprep.subr.bf16.mxu0 0
        %475 = vmatpush1.bf16.msra.mxu0 0
        %476 = vmatprep.subr.bf16.mxu0 0
        %477 = vmatpush1.bf16.msra.mxu0 0
        %478 = vmatprep.subr.bf16.mxu0 0
        %479 = vmatpush1.bf16.msra.mxu0 0
        %480 = vmatprep.subr.bf16.mxu0 0
        %481 = vmatpush1.bf16.msra.mxu0 0
        %482 = vmatprep.subr.bf16.mxu0 0
        %483 = vmatpush1.bf16.msra.mxu0 0
        %484 = vmatprep.subr.bf16.mxu0 0
        %485 = vmatpush1.bf16.msra.mxu0 0
        %486 = vmatprep.subr.bf16.mxu0 0
        %487 = vmatpush1.bf16.msra.mxu0 %v467
        %488 = vmatprep.subr.bf16.mxu0 0
        %489 = vmatpush1.bf16.msra.mxu0 %v466
        %490 = vmatprep.subr.bf16.mxu0 0
        %491 = vmatpush2.bf16.msra.mxu0 0
        %492 = vmatprep.subr.bf16.mxu0 0
        %493 = vmatpush2.bf16.msra.mxu0 0
        %494 = vmatprep.subr.bf16.mxu0 0
        %495 = vmatpush2.bf16.msra.mxu0 0
        %496 = vmatprep.subr.bf16.mxu0 0
        %497 = vmatpush2.bf16.msra.mxu0 0
        %498 = vmatprep.subr.bf16.mxu0 0
        %499 = vmatpush2.bf16.msra.mxu0 0
        %500 = vmatprep.subr.bf16.mxu0 0
        %501 = vmatpush2.bf16.msra.mxu0 0
        %502 = vmatprep.subr.bf16.mxu0 0
        %503 = vmatpush2.bf16.msra.mxu0 0
        %504 = vmatprep.subr.bf16.mxu0 0
        %505 = vmatpush2.bf16.msra.mxu0 0
        %506 = vmatprep.mubr.bf16.mxu0 0
        %507 = vmatmul.mubr.bf16.gmra.mxu0 %v472
        %v508 = vpop.f32.mrf.mxu0
        %v509 = vadd.f32 0.0, %v508
        %v510 = vpop.f32.mrf.mxu0
        %v511 = vpop.f32.mrf.mxu0
        %v512 = vpop.f32.mrf.mxu0
        %513 = vdwg.mxu0
        %v514 = vpack.c.bf16 %v509, %v509
        %v515 = vld [vmem:[#allocation10] sm:$0xf]
        %v516 = vld [vmem:[#allocation10 + $0x4] sm:$0xf]
        %v517 = vld [vmem:[#allocation10 + $0x8] sm:$0xf]
        %v518 = vld [vmem:[#allocation10 + $0xc] sm:$0xf]
        %v523 = vunpack.c.l.b16 %v515
        %v524 = vunpack.c.l.b16 %v516
        %v525 = vunpack.c.l.b16 %v517
        %v526 = vunpack.c.l.b16 %v518
        %v527 = vpack.c.b16 %v524, %v523
        %v528 = vpack.c.b16 %v526, %v525
        %v532 = vsel %vm470, %v452, 0
        %534 = vmatprep.subr.bf16.mxu0 0
        %535 = vmatpush1.bf16.msra.mxu0 0
        %536 = vmatprep.subr.bf16.mxu0 0
        %537 = vmatpush1.bf16.msra.mxu0 0
        %538 = vmatprep.subr.bf16.mxu0 0
        %539 = vmatpush1.bf16.msra.mxu0 0
        %540 = vmatprep.subr.bf16.mxu0 0
        %541 = vmatpush1.bf16.msra.mxu0 0
        %542 = vmatprep.subr.bf16.mxu0 0
        %543 = vmatpush1.bf16.msra.mxu0 0
        %544 = vmatprep.subr.bf16.mxu0 0
        %545 = vmatpush1.bf16.msra.mxu0 0
        %546 = vmatprep.subr.bf16.mxu0 0
        %547 = vmatpush1.bf16.msra.mxu0 %v528
        %548 = vmatprep.subr.bf16.mxu0 0
        %549 = vmatpush1.bf16.msra.mxu0 %v527
        %550 = vmatprep.subr.bf16.mxu0 0
        %551 = vmatpush2.bf16.msra.mxu0 0
        %552 = vmatprep.subr.bf16.mxu0 0
        %553 = vmatpush2.bf16.msra.mxu0 0
        %554 = vmatprep.subr.bf16.mxu0 0
        %555 = vmatpush2.bf16.msra.mxu0 0
        %556 = vmatprep.subr.bf16.mxu0 0
        %557 = vmatpush2.bf16.msra.mxu0 0
        %558 = vmatprep.subr.bf16.mxu0 0
        %559 = vmatpush2.bf16.msra.mxu0 0
        %560 = vmatprep.subr.bf16.mxu0 0
        %561 = vmatpush2.bf16.msra.mxu0 0
        %562 = vmatprep.subr.bf16.mxu0 0
        %563 = vmatpush2.bf16.msra.mxu0 0
        %564 = vmatprep.subr.bf16.mxu0 0
        %565 = vmatpush2.bf16.msra.mxu0 0
        %566 = vmatprep.mubr.bf16.mxu0 0
        %567 = vmatmul.mubr.bf16.gmra.mxu0 %v532
        %v568 = vpop.f32.mrf.mxu0
        %v569 = vadd.f32 0.0, %v568
        %v570 = vpop.f32.mrf.mxu0
        %v571 = vpop.f32.mrf.mxu0
        %v572 = vpop.f32.mrf.mxu0
        %573 = vdwg.mxu0
        %v574 = vpack.c.bf16 %v569, %v569
        %v575 = vld [vmem:[#allocation11] sm:$0xf]
        %v576 = vld [vmem:[#allocation11 + $0x4] sm:$0xf]
        %v577 = vld [vmem:[#allocation11 + $0x8] sm:$0xf]
        %v578 = vld [vmem:[#allocation11 + $0xc] sm:$0xf]
        %v583 = vunpack.c.l.b16 %v575
        %v584 = vunpack.c.l.b16 %v576
        %v585 = vunpack.c.l.b16 %v577
        %v586 = vunpack.c.l.b16 %v578
        %v587 = vpack.c.b16 %v584, %v583
        %v588 = vpack.c.b16 %v586, %v585
        %v592 = vsel %vm470, %v453, 0
        %594 = vmatprep.subr.bf16.mxu0 0
        %595 = vmatpush1.bf16.msra.mxu0 0
        %596 = vmatprep.subr.bf16.mxu0 0
        %597 = vmatpush1.bf16.msra.mxu0 0
        %598 = vmatprep.subr.bf16.mxu0 0
        %599 = vmatpush1.bf16.msra.mxu0 0
        %600 = vmatprep.subr.bf16.mxu0 0
        %601 = vmatpush1.bf16.msra.mxu0 0
        %602 = vmatprep.subr.bf16.mxu0 0
        %603 = vmatpush1.bf16.msra.mxu0 0
        %604 = vmatprep.subr.bf16.mxu0 0
        %605 = vmatpush1.bf16.msra.mxu0 0
        %606 = vmatprep.subr.bf16.mxu0 0
        %607 = vmatpush1.bf16.msra.mxu0 %v588
        %608 = vmatprep.subr.bf16.mxu0 0
        %609 = vmatpush1.bf16.msra.mxu0 %v587
        %610 = vmatprep.subr.bf16.mxu0 0
        %611 = vmatpush2.bf16.msra.mxu0 0
        %612 = vmatprep.subr.bf16.mxu0 0
        %613 = vmatpush2.bf16.msra.mxu0 0
        %614 = vmatprep.subr.bf16.mxu0 0
        %615 = vmatpush2.bf16.msra.mxu0 0
        %616 = vmatprep.subr.bf16.mxu0 0
        %617 = vmatpush2.bf16.msra.mxu0 0
        %618 = vmatprep.subr.bf16.mxu0 0
        %619 = vmatpush2.bf16.msra.mxu0 0
        %620 = vmatprep.subr.bf16.mxu0 0
        %621 = vmatpush2.bf16.msra.mxu0 0
        %622 = vmatprep.subr.bf16.mxu0 0
        %623 = vmatpush2.bf16.msra.mxu0 0
        %624 = vmatprep.subr.bf16.mxu0 0
        %625 = vmatpush2.bf16.msra.mxu0 0
        %626 = vmatprep.mubr.bf16.mxu0 0
        %627 = vmatmul.mubr.bf16.gmra.mxu0 %v592
        %v628 = vpop.f32.mrf.mxu0
        %v629 = vadd.f32 0.0, %v628
        %v630 = vpop.f32.mrf.mxu0
        %v631 = vpop.f32.mrf.mxu0
        %v632 = vpop.f32.mrf.mxu0
        %633 = vdwg.mxu0
        %v634 = vpack.c.bf16 %v629, %v629
        %v635 = vld [vmem:[%s7] sm:$0xff]
        %vm636 = vcmask 64512
        %v638 = vsel %vm636, %v514, 0
        %v641 = vsel %vm636, %v574, 0
        %643 = vmatprep.subr.bf16.mxu0 0
        %644 = vmatpush1.bf16.xpose.msra.mxu0 0
        %645 = vmatprep.subr.bf16.mxu0 0
        %646 = vmatpush1.bf16.xpose.msra.mxu0 0
        %647 = vmatprep.subr.bf16.mxu0 0
        %648 = vmatpush1.bf16.xpose.msra.mxu0 0
        %649 = vmatprep.subr.bf16.mxu0 0
        %650 = vmatpush1.bf16.xpose.msra.mxu0 0
        %651 = vmatprep.subr.bf16.mxu0 0
        %652 = vmatpush1.bf16.xpose.msra.mxu0 0
        %653 = vmatprep.subr.bf16.mxu0 0
        %654 = vmatpush1.bf16.xpose.msra.mxu0 0
        %655 = vmatprep.subr.bf16.mxu0 0
        %656 = vmatpush1.bf16.xpose.msra.mxu0 0
        %657 = vmatprep.subr.bf16.mxu0 0
        %658 = vmatpush1.bf16.xpose.msra.mxu0 %v641
        %659 = vmatprep.subr.bf16.mxu0 0
        %660 = vmatpush2.bf16.xpose.msra.mxu0 0
        %661 = vmatprep.subr.bf16.mxu0 0
        %662 = vmatpush2.bf16.xpose.msra.mxu0 0
        %663 = vmatprep.subr.bf16.mxu0 0
        %664 = vmatpush2.bf16.xpose.msra.mxu0 0
        %665 = vmatprep.subr.bf16.mxu0 0
        %666 = vmatpush2.bf16.xpose.msra.mxu0 0
        %667 = vmatprep.subr.bf16.mxu0 0
        %668 = vmatpush2.bf16.xpose.msra.mxu0 0
        %669 = vmatprep.subr.bf16.mxu0 0
        %670 = vmatpush2.bf16.xpose.msra.mxu0 0
        %671 = vmatprep.subr.bf16.mxu0 0
        %672 = vmatpush2.bf16.xpose.msra.mxu0 0
        %673 = vmatprep.subr.bf16.mxu0 0
        %674 = vmatpush2.bf16.xpose.msra.mxu0 0
        %675 = vmatprep.mubr.bf16.mxu0 0
        %676 = vmatmul.mubr.bf16.gmra.mxu0 %v638
        %v677 = vpop.f32.mrf.mxu0
        %v678 = vadd.f32 %v635, %v677
        %v679 = vpop.f32.mrf.mxu0
        %v680 = vpop.f32.mrf.mxu0
        %v681 = vpop.f32.mrf.mxu0
        %682 = vdwg.mxu0
        %v683 = vsel %vm636, %v678, -inf
        %684 = vmax.xlane.f32.xlu0 %v683
        %v685 = vpop.xlane.xlu0 %684
        %v686 = vsub.f32 %v678, %v685
        %v687 = vmul.f32 %v686, 1.442695
        %v688 = vpow.pop %v687
        %v689 = vsel %vm636, %v688, 0.0
        %690 = vadd.xlane.f32.xlu0 %v689
        %v691 = vpop.xlane.xlu0 %690
        %v692 = vrcp.pop %v691
        %v693 = vmul.f32 %v688, %v692
        %v694 = vpack.c.bf16 %v693, %v693
        %v696 = vsel %vm636, %v694, 0
        %vm698 = vcmask 1043456
        %v700 = vsel %vm698, %v634, 0
        %702 = vmatprep.subr.bf16.mxu0 0
        %703 = vmatpush1.bf16.msra.mxu0 0
        %704 = vmatprep.subr.bf16.mxu0 0
        %705 = vmatpush1.bf16.msra.mxu0 0
        %706 = vmatprep.subr.bf16.mxu0 0
        %707 = vmatpush1.bf16.msra.mxu0 0
        %708 = vmatprep.subr.bf16.mxu0 0
        %709 = vmatpush1.bf16.msra.mxu0 0
        %710 = vmatprep.subr.bf16.mxu0 0
        %711 = vmatpush1.bf16.msra.mxu0 0
        %712 = vmatprep.subr.bf16.mxu0 0
        %713 = vmatpush1.bf16.msra.mxu0 0
        %714 = vmatprep.subr.bf16.mxu0 0
        %715 = vmatpush1.bf16.msra.mxu0 0
        %716 = vmatprep.subr.bf16.mxu0 0
        %717 = vmatpush1.bf16.msra.mxu0 %v700
        %718 = vmatprep.subr.bf16.mxu0 0
        %719 = vmatpush2.bf16.msra.mxu0 0
        %720 = vmatprep.subr.bf16.mxu0 0
        %721 = vmatpush2.bf16.msra.mxu0 0
        %722 = vmatprep.subr.bf16.mxu0 0
        %723 = vmatpush2.bf16.msra.mxu0 0
        %724 = vmatprep.subr.bf16.mxu0 0
        %725 = vmatpush2.bf16.msra.mxu0 0
        %726 = vmatprep.subr.bf16.mxu0 0
        %727 = vmatpush2.bf16.msra.mxu0 0
        %728 = vmatprep.subr.bf16.mxu0 0
        %729 = vmatpush2.bf16.msra.mxu0 0
        %730 = vmatprep.subr.bf16.mxu0 0
        %731 = vmatpush2.bf16.msra.mxu0 0
        %732 = vmatprep.subr.bf16.mxu0 0
        %733 = vmatpush2.bf16.msra.mxu0 0
        %734 = vmatprep.mubr.bf16.mxu0 0
        %735 = vmatmul.mubr.bf16.gmra.mxu0 %v696
        %v736 = vpop.f32.mrf.mxu0
        %v737 = vadd.f32 0.0, %v736
        %v738 = vpop.f32.mrf.mxu0
        %v739 = vpop.f32.mrf.mxu0
        %v740 = vpop.f32.mrf.mxu0
        %741 = vdwg.mxu0
        %v742 = vpack.c.bf16 %v737, %v737
        %744 = vrot.lane.b32.xlu0 %v514, 120
        %v745 = vpop.permute.xlu0 %744
        %747 = vrot.lane.b32.xlu0 %v574, 120
        %v748 = vpop.permute.xlu0 %747
        %v750 = vsel %vm636, %v745, 0
        %v753 = vsel %vm636, %v748, 0
        %755 = vmatprep.subr.bf16.mxu0 0
        %756 = vmatpush1.bf16.xpose.msra.mxu0 0
        %757 = vmatprep.subr.bf16.mxu0 0
        %758 = vmatpush1.bf16.xpose.msra.mxu0 0
        %759 = vmatprep.subr.bf16.mxu0 0
        %760 = vmatpush1.bf16.xpose.msra.mxu0 0
        %761 = vmatprep.subr.bf16.mxu0 0
        %762 = vmatpush1.bf16.xpose.msra.mxu0 0
        %763 = vmatprep.subr.bf16.mxu0 0
        %764 = vmatpush1.bf16.xpose.msra.mxu0 0
        %765 = vmatprep.subr.bf16.mxu0 0
        %766 = vmatpush1.bf16.xpose.msra.mxu0 0
        %767 = vmatprep.subr.bf16.mxu0 0
        %768 = vmatpush1.bf16.xpose.msra.mxu0 0
        %769 = vmatprep.subr.bf16.mxu0 0
        %770 = vmatpush1.bf16.xpose.msra.mxu0 %v753
        %771 = vmatprep.subr.bf16.mxu0 0
        %772 = vmatpush2.bf16.xpose.msra.mxu0 0
        %773 = vmatprep.subr.bf16.mxu0 0
        %774 = vmatpush2.bf16.xpose.msra.mxu0 0
        %775 = vmatprep.subr.bf16.mxu0 0
        %776 = vmatpush2.bf16.xpose.msra.mxu0 0
        %777 = vmatprep.subr.bf16.mxu0 0
        %778 = vmatpush2.bf16.xpose.msra.mxu0 0
        %779 = vmatprep.subr.bf16.mxu0 0
        %780 = vmatpush2.bf16.xpose.msra.mxu0 0
        %781 = vmatprep.subr.bf16.mxu0 0
        %782 = vmatpush2.bf16.xpose.msra.mxu0 0
        %783 = vmatprep.subr.bf16.mxu0 0
        %784 = vmatpush2.bf16.xpose.msra.mxu0 0
        %785 = vmatprep.subr.bf16.mxu0 0
        %786 = vmatpush2.bf16.xpose.msra.mxu0 0
        %787 = vmatprep.mubr.bf16.mxu0 0
        %788 = vmatmul.mubr.bf16.gmra.mxu0 %v750
        %v789 = vpop.f32.mrf.mxu0
        %v790 = vadd.f32 %v635, %v789
        %v791 = vpop.f32.mrf.mxu0
        %v792 = vpop.f32.mrf.mxu0
        %v793 = vpop.f32.mrf.mxu0
        %794 = vdwg.mxu0
        %v795 = vsel %vm636, %v790, -inf
        %796 = vmax.xlane.f32.xlu0 %v795
        %v797 = vpop.xlane.xlu0 %796
        %v798 = vsub.f32 %v790, %v797
        %v799 = vmul.f32 %v798, 1.442695
        %v800 = vpow.pop %v799
        %v801 = vsel %vm636, %v800, 0.0
        %802 = vadd.xlane.f32.xlu0 %v801
        %v803 = vpop.xlane.xlu0 %802
        %v804 = vrcp.pop %v803
        %v805 = vmul.f32 %v800, %v804
        %v806 = vpack.c.bf16 %v805, %v805
        %808 = vrot.lane.b32.xlu0 %v634, 120
        %v809 = vpop.permute.xlu0 %808
        %v811 = vsel %vm636, %v806, 0
        %v814 = vsel %vm698, %v809, 0
        %816 = vmatprep.subr.bf16.mxu0 0
        %817 = vmatpush1.bf16.msra.mxu0 0
        %818 = vmatprep.subr.bf16.mxu0 0
        %819 = vmatpush1.bf16.msra.mxu0 0
        %820 = vmatprep.subr.bf16.mxu0 0
        %821 = vmatpush1.bf16.msra.mxu0 0
        %822 = vmatprep.subr.bf16.mxu0 0
        %823 = vmatpush1.bf16.msra.mxu0 0
        %824 = vmatprep.subr.bf16.mxu0 0
        %825 = vmatpush1.bf16.msra.mxu0 0
        %826 = vmatprep.subr.bf16.mxu0 0
        %827 = vmatpush1.bf16.msra.mxu0 0
        %828 = vmatprep.subr.bf16.mxu0 0
        %829 = vmatpush1.bf16.msra.mxu0 0
        %830 = vmatprep.subr.bf16.mxu0 0
        %831 = vmatpush1.bf16.msra.mxu0 %v814
        %832 = vmatprep.subr.bf16.mxu0 0
        %833 = vmatpush2.bf16.msra.mxu0 0
        %834 = vmatprep.subr.bf16.mxu0 0
        %835 = vmatpush2.bf16.msra.mxu0 0
        %836 = vmatprep.subr.bf16.mxu0 0
        %837 = vmatpush2.bf16.msra.mxu0 0
        %838 = vmatprep.subr.bf16.mxu0 0
        %839 = vmatpush2.bf16.msra.mxu0 0
        %840 = vmatprep.subr.bf16.mxu0 0
        %841 = vmatpush2.bf16.msra.mxu0 0
        %842 = vmatprep.subr.bf16.mxu0 0
        %843 = vmatpush2.bf16.msra.mxu0 0
        %844 = vmatprep.subr.bf16.mxu0 0
        %845 = vmatpush2.bf16.msra.mxu0 0
        %846 = vmatprep.subr.bf16.mxu0 0
        %847 = vmatpush2.bf16.msra.mxu0 0
        %848 = vmatprep.mubr.bf16.mxu0 0
        %849 = vmatmul.mubr.bf16.gmra.mxu0 %v811
        %v850 = vpop.f32.mrf.mxu0
        %v851 = vadd.f32 0.0, %v850
        %v852 = vpop.f32.mrf.mxu0
        %v853 = vpop.f32.mrf.mxu0
        %v854 = vpop.f32.mrf.mxu0
        %855 = vdwg.mxu0
        %v856 = vpack.c.bf16 %v851, %v851
        %857 = vrot.lane.b32.xlu0 %v514, 112
        %v858 = vpop.permute.xlu0 %857
        %859 = vrot.lane.b32.xlu0 %v574, 112
        %v860 = vpop.permute.xlu0 %859
        %v862 = vsel %vm636, %v858, 0
        %v865 = vsel %vm636, %v860, 0
        %867 = vmatprep.subr.bf16.mxu0 0
        %868 = vmatpush1.bf16.xpose.msra.mxu0 0
        %869 = vmatprep.subr.bf16.mxu0 0
        %870 = vmatpush1.bf16.xpose.msra.mxu0 0
        %871 = vmatprep.subr.bf16.mxu0 0
        %872 = vmatpush1.bf16.xpose.msra.mxu0 0
        %873 = vmatprep.subr.bf16.mxu0 0
        %874 = vmatpush1.bf16.xpose.msra.mxu0 0
        %875 = vmatprep.subr.bf16.mxu0 0
        %876 = vmatpush1.bf16.xpose.msra.mxu0 0
        %877 = vmatprep.subr.bf16.mxu0 0
        %878 = vmatpush1.bf16.xpose.msra.mxu0 0
        %879 = vmatprep.subr.bf16.mxu0 0
        %880 = vmatpush1.bf16.xpose.msra.mxu0 0
        %881 = vmatprep.subr.bf16.mxu0 0
        %882 = vmatpush1.bf16.xpose.msra.mxu0 %v865
        %883 = vmatprep.subr.bf16.mxu0 0
        %884 = vmatpush2.bf16.xpose.msra.mxu0 0
        %885 = vmatprep.subr.bf16.mxu0 0
        %886 = vmatpush2.bf16.xpose.msra.mxu0 0
        %887 = vmatprep.subr.bf16.mxu0 0
        %888 = vmatpush2.bf16.xpose.msra.mxu0 0
        %889 = vmatprep.subr.bf16.mxu0 0
        %890 = vmatpush2.bf16.xpose.msra.mxu0 0
        %891 = vmatprep.subr.bf16.mxu0 0
        %892 = vmatpush2.bf16.xpose.msra.mxu0 0
        %893 = vmatprep.subr.bf16.mxu0 0
        %894 = vmatpush2.bf16.xpose.msra.mxu0 0
        %895 = vmatprep.subr.bf16.mxu0 0
        %896 = vmatpush2.bf16.xpose.msra.mxu0 0
        %897 = vmatprep.subr.bf16.mxu0 0
        %898 = vmatpush2.bf16.xpose.msra.mxu0 0
        %899 = vmatprep.mubr.bf16.mxu0 0
        %900 = vmatmul.mubr.bf16.gmra.mxu0 %v862
        %v901 = vpop.f32.mrf.mxu0
        %v902 = vadd.f32 %v635, %v901
        %v903 = vpop.f32.mrf.mxu0
        %v904 = vpop.f32.mrf.mxu0
        %v905 = vpop.f32.mrf.mxu0
        %906 = vdwg.mxu0
        %v907 = vsel %vm636, %v902, -inf
        %908 = vmax.xlane.f32.xlu0 %v907
        %v909 = vpop.xlane.xlu0 %908
        %v910 = vsub.f32 %v902, %v909
        %v911 = vmul.f32 %v910, 1.442695
        %v912 = vpow.pop %v911
        %v913 = vsel %vm636, %v912, 0.0
        %914 = vadd.xlane.f32.xlu0 %v913
        %v915 = vpop.xlane.xlu0 %914
        %v916 = vrcp.pop %v915
        %v917 = vmul.f32 %v912, %v916
        %v918 = vpack.c.bf16 %v917, %v917
        %919 = vrot.lane.b32.xlu0 %v634, 112
        %v920 = vpop.permute.xlu0 %919
        %v922 = vsel %vm636, %v918, 0
        %v925 = vsel %vm698, %v920, 0
        %927 = vmatprep.subr.bf16.mxu0 0
        %928 = vmatpush1.bf16.msra.mxu0 0
        %929 = vmatprep.subr.bf16.mxu0 0
        %930 = vmatpush1.bf16.msra.mxu0 0
        %931 = vmatprep.subr.bf16.mxu0 0
        %932 = vmatpush1.bf16.msra.mxu0 0
        %933 = vmatprep.subr.bf16.mxu0 0
        %934 = vmatpush1.bf16.msra.mxu0 0
        %935 = vmatprep.subr.bf16.mxu0 0
        %936 = vmatpush1.bf16.msra.mxu0 0
        %937 = vmatprep.subr.bf16.mxu0 0
        %938 = vmatpush1.bf16.msra.mxu0 0
        %939 = vmatprep.subr.bf16.mxu0 0
        %940 = vmatpush1.bf16.msra.mxu0 0
        %941 = vmatprep.subr.bf16.mxu0 0
        %942 = vmatpush1.bf16.msra.mxu0 %v925
        %943 = vmatprep.subr.bf16.mxu0 0
        %944 = vmatpush2.bf16.msra.mxu0 0
        %945 = vmatprep.subr.bf16.mxu0 0
        %946 = vmatpush2.bf16.msra.mxu0 0
        %947 = vmatprep.subr.bf16.mxu0 0
        %948 = vmatpush2.bf16.msra.mxu0 0
        %949 = vmatprep.subr.bf16.mxu0 0
        %950 = vmatpush2.bf16.msra.mxu0 0
        %951 = vmatprep.subr.bf16.mxu0 0
        %952 = vmatpush2.bf16.msra.mxu0 0
        %953 = vmatprep.subr.bf16.mxu0 0
        %954 = vmatpush2.bf16.msra.mxu0 0
        %955 = vmatprep.subr.bf16.mxu0 0
        %956 = vmatpush2.bf16.msra.mxu0 0
        %957 = vmatprep.subr.bf16.mxu0 0
        %958 = vmatpush2.bf16.msra.mxu0 0
        %959 = vmatprep.mubr.bf16.mxu0 0
        %960 = vmatmul.mubr.bf16.gmra.mxu0 %v922
        %v961 = vpop.f32.mrf.mxu0
        %v962 = vadd.f32 0.0, %v961
        %v963 = vpop.f32.mrf.mxu0
        %v964 = vpop.f32.mrf.mxu0
        %v965 = vpop.f32.mrf.mxu0
        %966 = vdwg.mxu0
        %v967 = vpack.c.bf16 %v962, %v962
        %968 = vrot.lane.b32.xlu0 %v514, 104
        %v969 = vpop.permute.xlu0 %968
        %970 = vrot.lane.b32.xlu0 %v574, 104
        %v971 = vpop.permute.xlu0 %970
        %v973 = vsel %vm636, %v969, 0
        %v976 = vsel %vm636, %v971, 0
        %978 = vmatprep.subr.bf16.mxu0 0
        %979 = vmatpush1.bf16.xpose.msra.mxu0 0
        %980 = vmatprep.subr.bf16.mxu0 0
        %981 = vmatpush1.bf16.xpose.msra.mxu0 0
        %982 = vmatprep.subr.bf16.mxu0 0
        %983 = vmatpush1.bf16.xpose.msra.mxu0 0
        %984 = vmatprep.subr.bf16.mxu0 0
        %985 = vmatpush1.bf16.xpose.msra.mxu0 0
        %986 = vmatprep.subr.bf16.mxu0 0
        %987 = vmatpush1.bf16.xpose.msra.mxu0 0
        %988 = vmatprep.subr.bf16.mxu0 0
        %989 = vmatpush1.bf16.xpose.msra.mxu0 0
        %990 = vmatprep.subr.bf16.mxu0 0
        %991 = vmatpush1.bf16.xpose.msra.mxu0 0
        %992 = vmatprep.subr.bf16.mxu0 0
        %993 = vmatpush1.bf16.xpose.msra.mxu0 %v976
        %994 = vmatprep.subr.bf16.mxu0 0
        %995 = vmatpush2.bf16.xpose.msra.mxu0 0
        %996 = vmatprep.subr.bf16.mxu0 0
        %997 = vmatpush2.bf16.xpose.msra.mxu0 0
        %998 = vmatprep.subr.bf16.mxu0 0
        %999 = vmatpush2.bf16.xpose.msra.mxu0 0
        %1000 = vmatprep.subr.bf16.mxu0 0
        %1001 = vmatpush2.bf16.xpose.msra.mxu0 0
        %1002 = vmatprep.subr.bf16.mxu0 0
        %1003 = vmatpush2.bf16.xpose.msra.mxu0 0
        %1004 = vmatprep.subr.bf16.mxu0 0
        %1005 = vmatpush2.bf16.xpose.msra.mxu0 0
        %1006 = vmatprep.subr.bf16.mxu0 0
        %1007 = vmatpush2.bf16.xpose.msra.mxu0 0
        %1008 = vmatprep.subr.bf16.mxu0 0
        %1009 = vmatpush2.bf16.xpose.msra.mxu0 0
        %1010 = vmatprep.mubr.bf16.mxu0 0
        %1011 = vmatmul.mubr.bf16.gmra.mxu0 %v973
        %v1012 = vpop.f32.mrf.mxu0
        %v1013 = vadd.f32 %v635, %v1012
        %v1014 = vpop.f32.mrf.mxu0
        %v1015 = vpop.f32.mrf.mxu0
        %v1016 = vpop.f32.mrf.mxu0
        %1017 = vdwg.mxu0
        %v1018 = vsel %vm636, %v1013, -inf
        %1019 = vmax.xlane.f32.xlu0 %v1018
        %v1020 = vpop.xlane.xlu0 %1019
        %v1021 = vsub.f32 %v1013, %v1020
        %v1022 = vmul.f32 %v1021, 1.442695
        %v1023 = vpow.pop %v1022
        %v1024 = vsel %vm636, %v1023, 0.0
        %1025 = vadd.xlane.f32.xlu0 %v1024
        %v1026 = vpop.xlane.xlu0 %1025
        %v1027 = vrcp.pop %v1026
        %v1028 = vmul.f32 %v1023, %v1027
        %v1029 = vpack.c.bf16 %v1028, %v1028
        %1030 = vrot.lane.b32.xlu0 %v634, 104
        %v1031 = vpop.permute.xlu0 %1030
        %v1033 = vsel %vm636, %v1029, 0
        %v1036 = vsel %vm698, %v1031, 0
        %1038 = vmatprep.subr.bf16.mxu0 0
        %1039 = vmatpush1.bf16.msra.mxu0 0
        %1040 = vmatprep.subr.bf16.mxu0 0
        %1041 = vmatpush1.bf16.msra.mxu0 0
        %1042 = vmatprep.subr.bf16.mxu0 0
        %1043 = vmatpush1.bf16.msra.mxu0 0
        %1044 = vmatprep.subr.bf16.mxu0 0
        %1045 = vmatpush1.bf16.msra.mxu0 0
        %1046 = vmatprep.subr.bf16.mxu0 0
        %1047 = vmatpush1.bf16.msra.mxu0 0
        %1048 = vmatprep.subr.bf16.mxu0 0
        %1049 = vmatpush1.bf16.msra.mxu0 0
        %1050 = vmatprep.subr.bf16.mxu0 0
        %1051 = vmatpush1.bf16.msra.mxu0 0
        %1052 = vmatprep.subr.bf16.mxu0 0
        %1053 = vmatpush1.bf16.msra.mxu0 %v1036
        %1054 = vmatprep.subr.bf16.mxu0 0
        %1055 = vmatpush2.bf16.msra.mxu0 0
        %1056 = vmatprep.subr.bf16.mxu0 0
        %1057 = vmatpush2.bf16.msra.mxu0 0
        %1058 = vmatprep.subr.bf16.mxu0 0
        %1059 = vmatpush2.bf16.msra.mxu0 0
        %1060 = vmatprep.subr.bf16.mxu0 0
        %1061 = vmatpush2.bf16.msra.mxu0 0
        %1062 = vmatprep.subr.bf16.mxu0 0
        %1063 = vmatpush2.bf16.msra.mxu0 0
        %1064 = vmatprep.subr.bf16.mxu0 0
        %1065 = vmatpush2.bf16.msra.mxu0 0
        %1066 = vmatprep.subr.bf16.mxu0 0
        %1067 = vmatpush2.bf16.msra.mxu0 0
        %1068 = vmatprep.subr.bf16.mxu0 0
        %1069 = vmatpush2.bf16.msra.mxu0 0
        %1070 = vmatprep.mubr.bf16.mxu0 0
        %1071 = vmatmul.mubr.bf16.gmra.mxu0 %v1033
        %v1072 = vpop.f32.mrf.mxu0
        %v1073 = vadd.f32 0.0, %v1072
        %v1074 = vpop.f32.mrf.mxu0
        %v1075 = vpop.f32.mrf.mxu0
        %v1076 = vpop.f32.mrf.mxu0
        %1077 = vdwg.mxu0
        %v1078 = vpack.c.bf16 %v1073, %v1073
        %1080 = vrot.lane.b32.xlu0 %v856, 8
        %v1081 = vpop.permute.xlu0 %1080
        %1083 = vrot.lane.b32.xlu0 %v967, 16
        %v1084 = vpop.permute.xlu0 %1083
        %1086 = vrot.lane.b32.xlu0 %v1078, 24
        %v1087 = vpop.permute.xlu0 %1086
        %v1090 = vsel %vm636, %v742, %v1081
        %vm1091 = vcmask 130048
        %v1093 = vsel %vm1091, %v1090, %v1084
        %vm1094 = vcmask 195584
        %v1096 = vsel %vm1094, %v1093, %v1087
        %v1097 = vld [vmem:[#allocation13] sm:$0xf]
        %v1098 = vld [vmem:[#allocation13 + $0x4] sm:$0xf]
        %v1099 = vld [vmem:[#allocation13 + $0x8] sm:$0xf]
        %v1100 = vld [vmem:[#allocation13 + $0xc] sm:$0xf]
        %v1105 = vunpack.c.l.b16 %v1097
        %v1106 = vunpack.c.l.b16 %v1098
        %v1107 = vunpack.c.l.b16 %v1099
        %v1108 = vunpack.c.l.b16 %v1100
        %v1109 = vpack.c.b16 %v1106, %v1105
        %v1110 = vpack.c.b16 %v1108, %v1107
        %v1113 = vsel %vm470, %v1096, 0
        %1115 = vmatprep.subr.bf16.mxu0 0
        %1116 = vmatpush1.bf16.msra.mxu0 0
        %1117 = vmatprep.subr.bf16.mxu0 0
        %1118 = vmatpush1.bf16.msra.mxu0 0
        %1119 = vmatprep.subr.bf16.mxu0 0
        %1120 = vmatpush1.bf16.msra.mxu0 0
        %1121 = vmatprep.subr.bf16.mxu0 0
        %1122 = vmatpush1.bf16.msra.mxu0 0
        %1123 = vmatprep.subr.bf16.mxu0 0
        %1124 = vmatpush1.bf16.msra.mxu0 0
        %1125 = vmatprep.subr.bf16.mxu0 0
        %1126 = vmatpush1.bf16.msra.mxu0 0
        %1127 = vmatprep.subr.bf16.mxu0 0
        %1128 = vmatpush1.bf16.msra.mxu0 %v1110
        %1129 = vmatprep.subr.bf16.mxu0 0
        %1130 = vmatpush1.bf16.msra.mxu0 %v1109
        %1131 = vmatprep.subr.bf16.mxu0 0
        %1132 = vmatpush2.bf16.msra.mxu0 0
        %1133 = vmatprep.subr.bf16.mxu0 0
        %1134 = vmatpush2.bf16.msra.mxu0 0
        %1135 = vmatprep.subr.bf16.mxu0 0
        %1136 = vmatpush2.bf16.msra.mxu0 0
        %1137 = vmatprep.subr.bf16.mxu0 0
        %1138 = vmatpush2.bf16.msra.mxu0 0
        %1139 = vmatprep.subr.bf16.mxu0 0
        %1140 = vmatpush2.bf16.msra.mxu0 0
        %1141 = vmatprep.subr.bf16.mxu0 0
        %1142 = vmatpush2.bf16.msra.mxu0 0
        %1143 = vmatprep.subr.bf16.mxu0 0
        %1144 = vmatpush2.bf16.msra.mxu0 0
        %1145 = vmatprep.subr.bf16.mxu0 0
        %1146 = vmatpush2.bf16.msra.mxu0 0
        %1147 = vmatprep.mubr.bf16.mxu0 0
        %1148 = vmatmul.mubr.bf16.gmra.mxu0 %v1113
        %v1149 = vpop.f32.mrf.mxu0
        %v1150 = vadd.f32 0.0, %v1149
        %v1151 = vpop.f32.mrf.mxu0
        %v1152 = vpop.f32.mrf.mxu0
        %v1153 = vpop.f32.mrf.mxu0
        %1154 = vdwg.mxu0
        %1155 = vst.msk [vmem:[%s449] sm:$0xff] %vm470, %v1150
        %s1156 = sand.u32 %s221, 1
        %s1157 = scalar_lea.sflag [#allocation4], %s1156
        %s1158 = sand.u32 %s221, 1
        %s1159 = smul.addr %s1158, 8
        %s1160 = scalar_lea.vmem [#allocation14], %s1159
        // Predicated region
        $region81: #{tpu_custom_call.1} parent=51 // pred_check
          %p1161 = pneg %p231
        $region82: #{tpu_custom_call.1} parent=51 // pred_check_branch
          %1163 = sbr.rel (%p1161) target = $region84
        $region83: #{tpu_custom_call.1} parent=51 // pred_region
          %s1165 = ssub.s32 128, 128
          %1166 = vsyncadd %s1157, %s1165
          %s1167 = smul.addr %s30, 128
          %s1168 = scalar_lea.hbm %s8, %s1167
          %s1170 = sshll.u32 %s1160, 4
          %s1171 = int_to_ptr.vmem [resolvable:$true] %s1170
          %1173 = dma.vmem_to_hbm [thread:$0]  %s1171, 128, %s1168, %s1157
        $region84: #{tpu_custom_call.1} parent=51 // pred_fallthru
          _
      $region52: #{tpu_custom_call.1} parent=5 // pred_fallthru
        _
      %p1174 = scmp.le.s32.totalorder 2, %s25
      // Predicated region
      $region85: #{tpu_custom_call.1} parent=5 // pred_check
        %p1175 = pneg %p1174
      $region86: #{tpu_custom_call.1} parent=5 // pred_check_branch
        %1177 = sbr.rel (%p1175) target = $region88
      $region87: #{tpu_custom_call.1} parent=5 // pred_region
        %s1178 = ssub.s32 %s25, 2
        // Predicated region
        $region89: #{tpu_custom_call.1} parent=87 // pred_check
          %p1179 = pneg %p237
        $region90: #{tpu_custom_call.1} parent=87 // pred_check_branch
          %1181 = sbr.rel (%p1179) target = $region92
        $region91: #{tpu_custom_call.1} parent=87 // pred_region
          %s1182 = sand.u32 %s222, 1
          %s1183 = scalar_lea.sflag [#allocation4], %s1182
          %s1184 = sand.u32 %s222, 1
          %s1185 = smul.addr %s1184, 8
          %s1186 = scalar_lea.vmem [#allocation14], %s1185
          %1187 = dma.done %s1183, 128
        $region92: #{tpu_custom_call.1} parent=87 // pred_fallthru
          _
      $region88: #{tpu_custom_call.1} parent=5 // pred_fallthru
        _
    $region6: #{tpu_custom_call.1} parent=1 // loop_footer
      %s29 = sadd.s32 1, %s25
    $region7: #{tpu_custom_call.1} parent=1 // loop_footer_branch
      %24 = sbr.rel target = $region3
    $region8: #{tpu_custom_call.1} parent=1 // loop_exit
      _
    %1188 = vsyncpa [#allocation3], 1
    %s1189 = scalar_lea.sflag [#allocation3], 1
    %1190 = vsyncpa %s1189, 1
    %1191 = vsyncpa [#allocation6], 1
    %s1192 = scalar_lea.sflag [#allocation6], 1
    %1193 = vsyncpa %s1192, 1
    %1194 = vsyncpa [#allocation9], 1
    %1195 = vsyncpa [#allocation12], 1
    %1196 = vsyncpa [#allocation4], 1
    %s1197 = scalar_lea.sflag [#allocation4], 1
    %1198 = vsyncpa %s1197, 1

</llo_original>
